<compile_context>
chip_gen: v5e
topology: v5e:2x2
jax: 0.10.0
libtpu: 0.0.40
codegen_flags: <defaults>
</compile_context>

<pallas_src>
import jax
import jax.numpy as jnp
from jax import lax
from jax.experimental import pallas as pl
from jax.experimental.pallas import tpu as pltpu


# ----------------------------------------------------------------------------
# Small helpers
# ----------------------------------------------------------------------------
def _round_up(x, mult):
    return ((x + mult - 1) // mult) * mult


def _fold_bn(p, eps=1e-5):
    """Eval-mode BatchNorm folded into a per-channel (scale, bias)."""
    inv_std = 1.0 / jnp.sqrt(p["var"].astype(jnp.float32) + eps)
    scale = p["gamma"].astype(jnp.float32) * inv_std
    bias = p["beta"].astype(jnp.float32) - p["mean"].astype(jnp.float32) * scale
    return scale, bias


_VMEM_LIMIT_CACHE = []


def _vmem_limit_bytes():
    """Scoped-VMEM limit per chip generation: half of physical VMEM, capped at
    64 MiB (-> 64 MiB on v5e/v6e's 128 MiB, 32 MiB on v7x's 64 MiB)."""
    if not _VMEM_LIMIT_CACHE:
        try:
            cap = int(pltpu.get_tpu_info().vmem_capacity_bytes)
            limit = max(16 * 1024 * 1024, min(cap // 2, 64 * 1024 * 1024))
        except Exception:
            limit = 32 * 1024 * 1024          # safe on every generation
        _VMEM_LIMIT_CACHE.append(limit)
    return _VMEM_LIMIT_CACHE[0]


def _choose_tile_m(m, k, n, in_bytes, out_bytes, budget):
    """Row tile that (a) divides m exactly (no wrapper pad/slice round trip),
    (b) fits the VMEM budget counting BOTH buffers of the x/out tiles and the
    weight block, (c) stays in the measured 128..2048-row sweet spot."""
    if m <= 2048:
        return m                               # one full block; always layout-legal
    fixed = 2 * (k * n * in_bytes + 4 * n)     # double-buffered weight + bias
    per_row = 2 * (k * in_bytes + n * out_bytes)
    cap = (budget - fixed) // max(per_row, 1)
    cap = max(128, min(2048, (cap // 128) * 128))
    for tm in range(cap, 127, -128):           # prefer 128-multiple divisors
        if m % tm == 0:
            return tm
    for tm in range(min(cap, m) // 16 * 16, 15, -16):   # bf16 sublane multiple
        if m % tm == 0:
            return tm
    return m                                    # rare: no good divisor -> one block


# ----------------------------------------------------------------------------
# Pallas kernels
# ----------------------------------------------------------------------------
def _mm_bias_relu_kernel(x_ref, w_ref, b_ref, o_ref):
    # Single fused layer: (TM, K) @ (K, N) on the MXU (f32 acc) + folded-BN
    # bias + ReLU.  Used for the 7x7/s2 stem (im2col rows).
    acc = jnp.dot(x_ref[...], w_ref[...], preferred_element_type=jnp.float32)
    o_ref[...] = jnp.maximum(acc + b_ref[...], 0.0).astype(o_ref.dtype)


def _conv1x1_chain_kernel(x_ref, w_ref, b_ref, o_ref):
    # Fused chain of conv1x1+BN+ReLU layers.  grid = (M tiles, layers); the
    # activation is resident in the VMEM output block across the layer axis:
    # loaded from x at layer 0, matmul'ed in place each step, DMAed back to
    # HBM only when the M-tile index changes.
    layer = pl.program_id(1)

    @pl.when(layer == 0)
    def _():
        o_ref[...] = x_ref[...]

    y = jnp.dot(o_ref[...], w_ref[0], preferred_element_type=jnp.float32)
    o_ref[...] = jnp.maximum(y + b_ref[0], 0.0).astype(o_ref.dtype)


# ----------------------------------------------------------------------------
# pallas_call wrappers
# ----------------------------------------------------------------------------
def _fused_matmul_bias_relu(x2d, w2d, b2d, *, out_dtype):
    """(M, K) @ (K, N) + bias, ReLU.  N is a multiple of 128 (lane-dense);
    the M tile always divides M exactly (no pad/slice round trip)."""
    m, k = x2d.shape
    k2, n = w2d.shape
    assert k == k2 and n % 128 == 0, (x2d.shape, w2d.shape)
    vmem_limit = _vmem_limit_bytes()
    in_bytes = jnp.dtype(x2d.dtype).itemsize
    out_bytes = jnp.dtype(out_dtype).itemsize
    tm = _choose_tile_m(m, k, n, in_bytes, out_bytes, budget=vmem_limit * 3 // 4)
    assert m % tm == 0
    gm = m // tm

    return pl.pallas_call(
        _mm_bias_relu_kernel,
        out_shape=jax.ShapeDtypeStruct((m, n), out_dtype),
        grid_spec=pltpu.PrefetchScalarGridSpec(
            num_scalar_prefetch=0,
            grid=(gm,),
            in_specs=[
                pl.BlockSpec((tm, k), lambda i: (i, 0)),
                # Constant index map -> the weight/bias blocks are fetched once
                # and stay resident across the M grid (the VMEM budget above
                # still counts two buffers, keeping it honest on v7x).
                pl.BlockSpec((k, n), lambda i: (0, 0)),
                pl.BlockSpec((1, n), lambda i: (0, 0)),
            ],
            out_specs=pl.BlockSpec((tm, n), lambda i: (i, 0)),
        ),
        compiler_params=pltpu.CompilerParams(
            dimension_semantics=("parallel",),       # megacore / 2-TC sharding
            vmem_limit_bytes=vmem_limit,
        ),
    )(x2d, w2d, b2d)


def _fused_conv1x1_chain(x2d, w_stack, b_stack, *, out_dtype):
    """Fused chain of L conv1x1+BN+ReLU layers on a (M, Cp) activation.
    w_stack: (L, Cp, Cp) with BN scale folded, zero-padded to lane-dense Cp.
    b_stack: (L, 1, Cp) folded BN biases (f32)."""
    m, cp = x2d.shape
    num_layers, k, n = w_stack.shape
    assert k == cp and n == cp and cp % 128 == 0
    vmem_limit = _vmem_limit_bytes()
    in_bytes = jnp.dtype(x2d.dtype).itemsize
    out_bytes = jnp.dtype(out_dtype).itemsize
    tm = _choose_tile_m(m, cp, cp, in_bytes, out_bytes, budget=vmem_limit * 3 // 4)
    assert m % tm == 0
    gm = m // tm

    return pl.pallas_call(
        _conv1x1_chain_kernel,
        out_shape=jax.ShapeDtypeStruct((m, cp), out_dtype),
        grid_spec=pltpu.PrefetchScalarGridSpec(
            num_scalar_prefetch=0,
            grid=(gm, num_layers),
            in_specs=[
                # x fetched once per M tile (index constant across the layer axis)
                pl.BlockSpec((tm, cp), lambda i, l: (i, 0)),
                # per-layer weight / bias selected from the HBM stacks
                pl.BlockSpec((1, cp, cp), lambda i, l: (l, 0, 0)),
                pl.BlockSpec((1, 1, cp), lambda i, l: (l, 0, 0)),
            ],
            # output block revisited across the layer axis -> VMEM-resident
            # activation; written back to HBM once per M tile.
            out_specs=pl.BlockSpec((tm, cp), lambda i, l: (i, 0)),
        ),
        compiler_params=pltpu.CompilerParams(
            dimension_semantics=("parallel", "arbitrary"),
            vmem_limit_bytes=vmem_limit,
        ),
    )(x2d, w_stack, b_stack)


# ----------------------------------------------------------------------------
# One-time parameter preprocessing (hoisted out of the jitted forward)
# ----------------------------------------------------------------------------
def prepare_osnet_params(conv1_params, steps, *, compute_dtype):
    """Fold BN, transpose/pad/cast weights and stack the conv1x1 chains ONCE."""
    # --- stem 7x7/s2 ---
    w = conv1_params["w"]                       # (cout, cin, 7, 7)
    cout, cin, kh, kw = w.shape
    scale, bias = _fold_bn(conv1_params)
    kdim = cin * kh * kw
    kdim_p = _round_up(kdim, 16)                # sublane multiple only, not 128
    cout_p = _round_up(cout, 128)               # lane-dense N
    # patches feature order is (c, kh, kw) == flattened PyTorch (cin, kh, kw)
    w2d = w.reshape(cout, kdim).T * scale[None, :]
    w2d = jnp.pad(w2d, ((0, kdim_p - kdim), (0, cout_p - cout))).astype(compute_dtype)
    b2d = jnp.pad(bias, (0, cout_p - cout)).reshape(1, cout_p).astype(jnp.float32)
    stem = dict(w=w2d, b=b2d, cout=cout, cout_p=cout_p, kdim=kdim, kdim_p=kdim_p,
                ksize=kh, stride=2, padding=3)

    # --- group conv1x1 layers between pooling ops into fused chains ---
    segments = []
    chain = []                                  # (wmat (cin,cout), bias (cout,), cin, cout)
    final_c = cout

    def flush():
        if not chain:
            return
        cp = _round_up(max(max(ci, co) for _, _, ci, co in chain), 128)
        ws, bs = [], []
        for wmat, bvec, ci, co in chain:
            ws.append(jnp.pad(wmat, ((0, cp - ci), (0, cp - co))))
            bs.append(jnp.pad(bvec, (0, cp - co)))
        segments.append(dict(
            kind="chain",
            w=jnp.stack(ws).astype(compute_dtype),                         # (L, cp, cp)
            b=jnp.stack(bs).reshape(len(bs), 1, cp).astype(jnp.float32),   # (L, 1, cp)
            cp=cp, cout=chain[-1][3]))
        chain.clear()

    for kind, p in steps:
        if kind == "conv1x1":
            wc = p["w"]                          # (cout, cin, 1, 1)
            co, ci = wc.shape[0], wc.shape[1]
            scale, bias = _fold_bn(p)
            wmat = wc.reshape(co, ci).T * scale[None, :]   # BN scale folded into W
            chain.append((wmat, bias, ci, co))
            final_c = co
        elif kind == "avgpool":
            flush()
            segments.append(dict(kind="avgpool"))
        else:
            raise ValueError(kind)
    flush()
    return dict(stem=stem, segments=segments, final_c=final_c)


# ----------------------------------------------------------------------------
# Pooling glue (XLA) -- TODO(synk): not Pallas; foldable into adjacent kernels.
# ----------------------------------------------------------------------------
def _maxpool_3x3_s2_p1_nhwc(x):
    neg_inf = jnp.array(-jnp.inf, dtype=x.dtype)
    return lax.reduce_window(x, neg_inf, lax.max,
                             (1, 3, 3, 1), (1, 2, 2, 1),
                             [(0, 0), (1, 1), (1, 1), (0, 0)])


def _avgpool_2x2_nhwc(x):
    # 2x2/s2 average pool, computed in the activation dtype (no f32 round trip).
    n, h, w, c = x.shape
    x = x[:, : (h // 2) * 2, : (w // 2) * 2, :]
    x = x.reshape(n, h // 2, 2, w // 2, 2, c)
    s = x[:, :, 0, :, 0, :] + x[:, :, 0, :, 1, :] + x[:, :, 1, :, 0, :] + x[:, :, 1, :, 1, :]
    return (s * jnp.asarray(0.25, s.dtype)).astype(x.dtype)


# ----------------------------------------------------------------------------
# Full OSNet forward (conv1 -> maxpool -> conv2 -> conv3 -> conv4 -> conv5)
# ----------------------------------------------------------------------------
def osnet_forward(x_nchw, prepped, *, compute_dtype=jnp.bfloat16):
    """Activations stay NHWC, channel-padded to a multiple of 128, for the whole
    network; NCHW<->NHWC conversion only at the model boundaries."""
    st = prepped["stem"]
    x = jnp.transpose(x_nchw, (0, 2, 3, 1)).astype(compute_dtype)    # boundary in

    # Stem 7x7/s2 conv as patches + fused Pallas matmul+bias+ReLU.
    patches = lax.conv_general_dilated_patches(
        x, (st["ksize"], st["ksize"]), (st["stride"], st["stride"]),
        [(st["padding"], st["padding"]), (st["padding"], st["padding"])],
        dimension_numbers=("NHWC", "HWIO", "NHWC"))
    n, ho, wo, kdim = patches.shape
    x2d = patches.reshape(n * ho * wo, kdim)
    if kdim != st["kdim_p"]:
        x2d = jnp.pad(x2d, ((0, 0), (0, st["kdim_p"] - kdim)))       # 147 -> 160 only
    y2d = _fused_matmul_bias_relu(x2d.astype(compute_dtype), st["w"], st["b"],
                                  out_dtype=compute_dtype)
    x = y2d.reshape(n, ho, wo, st["cout_p"])
    x = _maxpool_3x3_s2_p1_nhwc(x)

    c = st["cout"]
    for seg in prepped["segments"]:
        if seg["kind"] == "chain":
            nb, h, w, cpx = x.shape
            cp = seg["cp"]
            if cpx < cp:        # adjust padded width at chain entry (no-op here)
                x = jnp.pad(x, ((0, 0), (0, 0), (0, 0), (0, cp - cpx)))
            elif cpx > cp:      # extra lanes are guaranteed zero -> safe to drop
                x = x[..., :cp]
            y2d = _fused_conv1x1_chain(x.reshape(nb * h * w, cp), seg["w"], seg["b"],
                                       out_dtype=compute_dtype)
            x = y2d.reshape(nb, h, w, cp)
            c = seg["cout"]
        else:
            x = _avgpool_2x2_nhwc(x)

    y = x[..., :c].astype(x_nchw.dtype)                              # boundary out
    return jnp.transpose(y, (0, 3, 1, 2))


# ----------------------------------------------------------------------------
# Pure-JAX (XLA) reference with identical eval-mode semantics
# ----------------------------------------------------------------------------
def _ref_conv_bn_relu(x, p, stride, padding, eps=1e-5):
    y = lax.conv_general_dilated(
        x, p["w"], (stride, stride), [(padding, padding), (padding, padding)],
        dimension_numbers=("NCHW", "OIHW", "NCHW"),
        precision=lax.Precision.HIGHEST)
    scale, bias = _fold_bn(p, eps)
    y = y * scale[None, :, None, None] + bias[None, :, None, None]
    return jnp.maximum(y, 0.0)


def _ref_maxpool(x):
    return lax.reduce_window(x, -jnp.inf, lax.max,
                             (1, 1, 3, 3), (1, 1, 2, 2),
                             [(0, 0), (0, 0), (1, 1), (1, 1)])


def _ref_avgpool(x):
    n, c, h, w = x.shape
    x = x[:, :, : (h // 2) * 2, : (w // 2) * 2]
    return x.reshape(n, c, h // 2, 2, w // 2, 2).mean(axis=(3, 5))


def osnet_reference(x, conv1_params, steps):
    x = _ref_conv_bn_relu(x, conv1_params, stride=2, padding=3)
    x = _ref_maxpool(x)
    for kind, p in steps:
        if kind == "conv1x1":
            x = _ref_conv_bn_relu(x, p, stride=1, padding=0)
        elif kind == "avgpool":
            x = _ref_avgpool(x)
    return x


# ----------------------------------------------------------------------------
# Parameter construction
# ----------------------------------------------------------------------------
def _make_conv_bn_params(key, cout, cin, ksize):
    kw, kg, kb, km, kv = jax.random.split(key, 5)
    fan = cin * ksize * ksize
    return {
        "w": jax.random.normal(kw, (cout, cin, ksize, ksize), jnp.float32)
             * (2.0 / fan) ** 0.5,
        "gamma": 1.0 + 0.1 * jax.random.normal(kg, (cout,), jnp.float32),
        "beta": 0.1 * jax.random.normal(kb, (cout,), jnp.float32),
        "mean": 0.1 * jax.random.normal(km, (cout,), jnp.float32),
        "var": 0.5 + jax.random.uniform(kv, (cout,), jnp.float32),
    }


if __name__ == "__main__":
    key = jax.random.PRNGKey(0)
    k_x, k_p = jax.random.split(key)

    batch, spatial = 2, 32
    channels = (8, 16, 24, 32)       # small channels[0..3]
    layers = (1, 1, 1)

    x = jax.random.normal(k_x, (batch, 3, spatial, spatial), jnp.float32)

    keys = iter(jax.random.split(k_p, 16))
    conv1_p = _make_conv_bn_params(next(keys), channels[0], 3, 7)

    # blocks = Conv1x1 (the block type defined in the spec); OSBlock not provided.
    steps = []
    in_c = channels[0]
    stage_cfg = [(layers[0], channels[1], True),
                 (layers[1], channels[2], True),
                 (layers[2], channels[3], False)]
    for n_layers, out_c, reduce_spatial in stage_cfg:
        steps.append(("conv1x1", _make_conv_bn_params(next(keys), out_c, in_c, 1)))
        for _ in range(1, n_layers):
            steps.append(("conv1x1", _make_conv_bn_params(next(keys), out_c, out_c, 1)))
        if reduce_spatial:
            steps.append(("conv1x1", _make_conv_bn_params(next(keys), out_c, out_c, 1)))
            steps.append(("avgpool", None))
        in_c = out_c
    steps.append(("conv1x1", _make_conv_bn_params(next(keys), in_c, in_c, 1)))  # conv5

    # One-time weight preprocessing (BN fold, pad, stack, cast) -- hoisted out of jit.
    prep_bf16 = prepare_osnet_params(conv1_p, steps, compute_dtype=jnp.bfloat16)
    prep_f32 = prepare_osnet_params(conv1_p, steps, compute_dtype=jnp.float32)

    fwd_bf16 = jax.jit(lambda xi: osnet_forward(xi, prep_bf16, compute_dtype=jnp.bfloat16))
    fwd_f32 = jax.jit(lambda xi: osnet_forward(xi, prep_f32, compute_dtype=jnp.float32))

    y_bf16 = jax.block_until_ready(fwd_bf16(x))
    y_f32 = jax.block_until_ready(fwd_f32(x))
    ref = jax.block_until_ready(osnet_reference(x, conv1_p, steps))

    out_spatial = spatial // 16      # /2 conv1, /2 maxpool, /2 /2 avgpools
    assert y_bf16.shape == (batch, channels[3], out_spatial, out_spatial)
    assert y_f32.shape == ref.shape == y_bf16.shape

    # f32 path: tight check of the kernel / fusion / layout logic.
    assert bool(jnp.allclose(y_f32, ref, atol=5e-3, rtol=5e-3))
    # bf16 path (production config): per-layer relative error ~2^-9 -> looser check.
    assert bool(jnp.allclose(y_bf16.astype(jnp.float32), ref, atol=0.25, rtol=0.1))

    print("KERNEL_OK")
</pallas_src>

<mosaic_0001>
module attributes {stable_mosaic.version = 11 : i64} {
  func.func @_mm_bias_relu_kernel(%arg0: i32, %arg1: memref<512x160xbf16, #tpu.memory_space<vmem>>, %arg2: memref<160x128xbf16, #tpu.memory_space<vmem>>, %arg3: memref<1x128xf32, #tpu.memory_space<vmem>>, %arg4: memref<512x128xbf16, #tpu.memory_space<vmem>>) attributes {dimension_semantics = [#tpu.dimension_semantics<parallel>], iteration_bounds = array<i64: 1>, scalar_prefetch = 0 : i64, scratch_operands = 0 : i64, tpu.core_type = #tpu.core_type<tc>, window_params = [{transform_indices = @transform_0, window_bounds = array<i64: 512, 160>}, {pipeline_mode = #tpu.pipeline_mode<synchronous>, transform_indices = @transform_1, window_bounds = array<i64: 160, 128>}, {pipeline_mode = #tpu.pipeline_mode<synchronous>, transform_indices = @transform_2, window_bounds = array<i64: 1, 128>}, {transform_indices = @transform_3, window_bounds = array<i64: 512, 128>}]} {
    %c0 = arith.constant 0 : index
    %c0_0 = arith.constant 0 : index
    %0 = vector.load %arg1[%c0, %c0_0] : memref<512x160xbf16, #tpu.memory_space<vmem>>, vector<512x160xbf16>
    %c0_1 = arith.constant 0 : index
    %c0_2 = arith.constant 0 : index
    %1 = vector.load %arg2[%c0_1, %c0_2] : memref<160x128xbf16, #tpu.memory_space<vmem>>, vector<160x128xbf16>
    %cst = arith.constant dense<0.000000e+00> : vector<512x128xf32>
    %2 = tpu.matmul %0, %1, %cst {dimension_numbers = #tpu.dot_dimension_numbers<[1], [0], [0], [1], [0, 0, 1, 1], [], []>} : vector<512x160xbf16>, vector<160x128xbf16>, vector<512x128xf32> -> vector<512x128xf32>
    %c0_3 = arith.constant 0 : index
    %c0_4 = arith.constant 0 : index
    %3 = vector.load %arg3[%c0_3, %c0_4] : memref<1x128xf32, #tpu.memory_space<vmem>>, vector<1x128xf32>
    %4 = vector.broadcast %3 : vector<1x128xf32> to vector<512x128xf32>
    %5 = arith.addf %2, %4 : vector<512x128xf32>
    %cst_5 = arith.constant 0.000000e+00 : f32
    %6 = vector.broadcast %cst_5 : f32 to vector<512x128xf32>
    %7 = arith.maximumf %5, %6 : vector<512x128xf32>
    %8 = arith.truncf %7 : vector<512x128xf32> to vector<512x128xbf16>
    %c0_6 = arith.constant 0 : index
    %c0_7 = arith.constant 0 : index
    %9 = vector.load %arg4[%c0_6, %c0_7] : memref<512x128xbf16, #tpu.memory_space<vmem>>, vector<512x128xbf16>
    tpu.vector_store %arg4[%c0_6, %c0_7], %8 {strides = array<i32>} : memref<512x128xbf16, #tpu.memory_space<vmem>>, vector<512x128xbf16>,
    return
  }
  func.func @transform_0(%arg0: i32) -> (i32, i32) {
    %c0_i32 = arith.constant 0 : i32
    %c0_i32_0 = arith.constant 0 : i32
    return %arg0, %c0_i32 : i32, i32
  }
  func.func @transform_1(%arg0: i32) -> (i32, i32) {
    %c0_i32 = arith.constant 0 : i32
    %c0_i32_0 = arith.constant 0 : i32
    %c0_i32_1 = arith.constant 0 : i32
    return %c0_i32, %c0_i32_0 : i32, i32
  }
  func.func @transform_2(%arg0: i32) -> (i32, i32) {
    %c0_i32 = arith.constant 0 : i32
    %c0_i32_0 = arith.constant 0 : i32
    %c0_i32_1 = arith.constant 0 : i32
    return %c0_i32, %c0_i32_0 : i32, i32
  }
  func.func @transform_3(%arg0: i32) -> (i32, i32) {
    %c0_i32 = arith.constant 0 : i32
    %c0_i32_0 = arith.constant 0 : i32
    return %arg0, %c0_i32 : i32, i32
  }
}

module attributes {stable_mosaic.version = 11 : i64} {
  func.func @_conv1x1_chain_kernel(%arg0: i32, %arg1: i32, %arg2: memref<128x128xbf16, #tpu.memory_space<vmem>>, %arg3: memref<1x128x128xbf16, #tpu.memory_space<vmem>>, %arg4: memref<1x1x128xf32, #tpu.memory_space<vmem>>, %arg5: memref<128x128xbf16, #tpu.memory_space<vmem>>) attributes {dimension_semantics = [#tpu.dimension_semantics<parallel>, #tpu.dimension_semantics<arbitrary>], iteration_bounds = array<i64: 1, 2>, scalar_prefetch = 0 : i64, scratch_operands = 0 : i64, tpu.core_type = #tpu.core_type<tc>, window_params = [{transform_indices = @transform_0, window_bounds = array<i64: 128, 128>}, {transform_indices = @transform_1, window_bounds = array<i64: 1, 128, 128>}, {transform_indices = @transform_2, window_bounds = array<i64: 1, 1, 128>}, {transform_indices = @transform_3, window_bounds = array<i64: 128, 128>}]} {
    %c0_i32 = arith.constant 0 : i32
    %0 = arith.cmpi eq, %arg1, %c0_i32 : i32
    %1 = arith.extui %0 : i1 to i32
    %c0_i32_0 = arith.constant 0 : i32
    %2 = arith.cmpi ne, %1, %c0_i32_0 : i32
    scf.if %2 {
      %c0_11 = arith.constant 0 : index
      %c0_12 = arith.constant 0 : index
      %15 = vector.load %arg2[%c0_11, %c0_12] : memref<128x128xbf16, #tpu.memory_space<vmem>>, vector<128x128xbf16>
      %c0_13 = arith.constant 0 : index
      %c0_14 = arith.constant 0 : index
      %16 = vector.load %arg5[%c0_13, %c0_14] : memref<128x128xbf16, #tpu.memory_space<vmem>>, vector<128x128xbf16>
      tpu.vector_store %arg5[%c0_13, %c0_14], %15 {strides = array<i32>} : memref<128x128xbf16, #tpu.memory_space<vmem>>, vector<128x128xbf16>,
    } else {
    }
    %c0 = arith.constant 0 : index
    %c0_1 = arith.constant 0 : index
    %3 = vector.load %arg5[%c0, %c0_1] : memref<128x128xbf16, #tpu.memory_space<vmem>>, vector<128x128xbf16>
    %c0_2 = arith.constant 0 : index
    %c0_3 = arith.constant 0 : index
    %c0_4 = arith.constant 0 : index
    %4 = vector.load %arg3[%c0_2, %c0_3, %c0_4] : memref<1x128x128xbf16, #tpu.memory_space<vmem>>, vector<1x128x128xbf16>
    %5 = vector.shape_cast %4 : vector<1x128x128xbf16> to vector<128x128xbf16>
    %cst = arith.constant dense<0.000000e+00> : vector<128x128xf32>
    %6 = tpu.matmul %3, %5, %cst {dimension_numbers = #tpu.dot_dimension_numbers<[1], [0], [0], [1], [0, 0, 1, 1], [], []>} : vector<128x128xbf16>, vector<128x128xbf16>, vector<128x128xf32> -> vector<128x128xf32>
    %c0_5 = arith.constant 0 : index
    %c0_6 = arith.constant 0 : index
    %c0_7 = arith.constant 0 : index
    %7 = vector.load %arg4[%c0_5, %c0_6, %c0_7] : memref<1x1x128xf32, #tpu.memory_space<vmem>>, vector<1x1x128xf32>
    %8 = vector.shape_cast %7 : vector<1x1x128xf32> to vector<1x128xf32>
    %9 = vector.broadcast %8 : vector<1x128xf32> to vector<128x128xf32>
    %10 = arith.addf %6, %9 : vector<128x128xf32>
    %cst_8 = arith.constant 0.000000e+00 : f32
    %11 = vector.broadcast %cst_8 : f32 to vector<128x128xf32>
    %12 = arith.maximumf %10, %11 : vector<128x128xf32>
    %13 = arith.truncf %12 : vector<128x128xf32> to vector<128x128xbf16>
    %c0_9 = arith.constant 0 : index
    %c0_10 = arith.constant 0 : index
    %14 = vector.load %arg5[%c0_9, %c0_10] : memref<128x128xbf16, #tpu.memory_space<vmem>>, vector<128x128xbf16>
    tpu.vector_store %arg5[%c0_9, %c0_10], %13 {strides = array<i32>} : memref<128x128xbf16, #tpu.memory_space<vmem>>, vector<128x128xbf16>,
    return
  }
  func.func @transform_0(%arg0: i32, %arg1: i32) -> (i32, i32) {
    %c0_i32 = arith.constant 0 : i32
    %c0_i32_0 = arith.constant 0 : i32
    return %arg0, %c0_i32 : i32, i32
  }
  func.func @transform_1(%arg0: i32, %arg1: i32) -> (i32, i32, i32) {
    %c0_i32 = arith.constant 0 : i32
    %c0_i32_0 = arith.constant 0 : i32
    %c0_i32_1 = arith.constant 0 : i32
    return %arg1, %c0_i32, %c0_i32_0 : i32, i32, i32
  }
  func.func @transform_2(%arg0: i32, %arg1: i32) -> (i32, i32, i32) {
    %c0_i32 = arith.constant 0 : i32
    %c0_i32_0 = arith.constant 0 : i32
    %c0_i32_1 = arith.constant 0 : i32
    return %arg1, %c0_i32, %c0_i32_0 : i32, i32, i32
  }
  func.func @transform_3(%arg0: i32, %arg1: i32) -> (i32, i32) {
    %c0_i32 = arith.constant 0 : i32
    %c0_i32_0 = arith.constant 0 : i32
    return %arg0, %c0_i32 : i32, i32
  }
}

module attributes {stable_mosaic.version = 11 : i64} {
  func.func @_conv1x1_chain_kernel(%arg0: i32, %arg1: i32, %arg2: memref<32x128xbf16, #tpu.memory_space<vmem>>, %arg3: memref<1x128x128xbf16, #tpu.memory_space<vmem>>, %arg4: memref<1x1x128xf32, #tpu.memory_space<vmem>>, %arg5: memref<32x128xbf16, #tpu.memory_space<vmem>>) attributes {dimension_semantics = [#tpu.dimension_semantics<parallel>, #tpu.dimension_semantics<arbitrary>], iteration_bounds = array<i64: 1, 2>, scalar_prefetch = 0 : i64, scratch_operands = 0 : i64, tpu.core_type = #tpu.core_type<tc>, window_params = [{transform_indices = @transform_0, window_bounds = array<i64: 32, 128>}, {transform_indices = @transform_1, window_bounds = array<i64: 1, 128, 128>}, {transform_indices = @transform_2, window_bounds = array<i64: 1, 1, 128>}, {transform_indices = @transform_3, window_bounds = array<i64: 32, 128>}]} {
    %c0_i32 = arith.constant 0 : i32
    %0 = arith.cmpi eq, %arg1, %c0_i32 : i32
    %1 = arith.extui %0 : i1 to i32
    %c0_i32_0 = arith.constant 0 : i32
    %2 = arith.cmpi ne, %1, %c0_i32_0 : i32
    scf.if %2 {
      %c0_11 = arith.constant 0 : index
      %c0_12 = arith.constant 0 : index
      %15 = vector.load %arg2[%c0_11, %c0_12] : memref<32x128xbf16, #tpu.memory_space<vmem>>, vector<32x128xbf16>
      %c0_13 = arith.constant 0 : index
      %c0_14 = arith.constant 0 : index
      %16 = vector.load %arg5[%c0_13, %c0_14] : memref<32x128xbf16, #tpu.memory_space<vmem>>, vector<32x128xbf16>
      tpu.vector_store %arg5[%c0_13, %c0_14], %15 {strides = array<i32>} : memref<32x128xbf16, #tpu.memory_space<vmem>>, vector<32x128xbf16>,
    } else {
    }
    %c0 = arith.constant 0 : index
    %c0_1 = arith.constant 0 : index
    %3 = vector.load %arg5[%c0, %c0_1] : memref<32x128xbf16, #tpu.memory_space<vmem>>, vector<32x128xbf16>
    %c0_2 = arith.constant 0 : index
    %c0_3 = arith.constant 0 : index
    %c0_4 = arith.constant 0 : index
    %4 = vector.load %arg3[%c0_2, %c0_3, %c0_4] : memref<1x128x128xbf16, #tpu.memory_space<vmem>>, vector<1x128x128xbf16>
    %5 = vector.shape_cast %4 : vector<1x128x128xbf16> to vector<128x128xbf16>
    %cst = arith.constant dense<0.000000e+00> : vector<32x128xf32>
    %6 = tpu.matmul %3, %5, %cst {dimension_numbers = #tpu.dot_dimension_numbers<[1], [0], [0], [1], [0, 0, 1, 1], [], []>} : vector<32x128xbf16>, vector<128x128xbf16>, vector<32x128xf32> -> vector<32x128xf32>
    %c0_5 = arith.constant 0 : index
    %c0_6 = arith.constant 0 : index
    %c0_7 = arith.constant 0 : index
    %7 = vector.load %arg4[%c0_5, %c0_6, %c0_7] : memref<1x1x128xf32, #tpu.memory_space<vmem>>, vector<1x1x128xf32>
    %8 = vector.shape_cast %7 : vector<1x1x128xf32> to vector<1x128xf32>
    %9 = vector.broadcast %8 : vector<1x128xf32> to vector<32x128xf32>
    %10 = arith.addf %6, %9 : vector<32x128xf32>
    %cst_8 = arith.constant 0.000000e+00 : f32
    %11 = vector.broadcast %cst_8 : f32 to vector<32x128xf32>
    %12 = arith.maximumf %10, %11 : vector<32x128xf32>
    %13 = arith.truncf %12 : vector<32x128xf32> to vector<32x128xbf16>
    %c0_9 = arith.constant 0 : index
    %c0_10 = arith.constant 0 : index
    %14 = vector.load %arg5[%c0_9, %c0_10] : memref<32x128xbf16, #tpu.memory_space<vmem>>, vector<32x128xbf16>
    tpu.vector_store %arg5[%c0_9, %c0_10], %13 {strides = array<i32>} : memref<32x128xbf16, #tpu.memory_space<vmem>>, vector<32x128xbf16>,
    return
  }
  func.func @transform_0(%arg0: i32, %arg1: i32) -> (i32, i32) {
    %c0_i32 = arith.constant 0 : i32
    %c0_i32_0 = arith.constant 0 : i32
    return %arg0, %c0_i32 : i32, i32
  }
  func.func @transform_1(%arg0: i32, %arg1: i32) -> (i32, i32, i32) {
    %c0_i32 = arith.constant 0 : i32
    %c0_i32_0 = arith.constant 0 : i32
    %c0_i32_1 = arith.constant 0 : i32
    return %arg1, %c0_i32, %c0_i32_0 : i32, i32, i32
  }
  func.func @transform_2(%arg0: i32, %arg1: i32) -> (i32, i32, i32) {
    %c0_i32 = arith.constant 0 : i32
    %c0_i32_0 = arith.constant 0 : i32
    %c0_i32_1 = arith.constant 0 : i32
    return %arg1, %c0_i32, %c0_i32_0 : i32, i32, i32
  }
  func.func @transform_3(%arg0: i32, %arg1: i32) -> (i32, i32) {
    %c0_i32 = arith.constant 0 : i32
    %c0_i32_0 = arith.constant 0 : i32
    return %arg0, %c0_i32 : i32, i32
  }
}

module attributes {stable_mosaic.version = 11 : i64} {
  func.func @_conv1x1_chain_kernel(%arg0: i32, %arg1: i32, %arg2: memref<8x128xbf16, #tpu.memory_space<vmem>>, %arg3: memref<1x128x128xbf16, #tpu.memory_space<vmem>>, %arg4: memref<1x1x128xf32, #tpu.memory_space<vmem>>, %arg5: memref<8x128xbf16, #tpu.memory_space<vmem>>) attributes {dimension_semantics = [#tpu.dimension_semantics<parallel>, #tpu.dimension_semantics<arbitrary>], iteration_bounds = array<i64: 1, 2>, scalar_prefetch = 0 : i64, scratch_operands = 0 : i64, tpu.core_type = #tpu.core_type<tc>, window_params = [{transform_indices = @transform_0, window_bounds = array<i64: 8, 128>}, {transform_indices = @transform_1, window_bounds = array<i64: 1, 128, 128>}, {transform_indices = @transform_2, window_bounds = array<i64: 1, 1, 128>}, {transform_indices = @transform_3, window_bounds = array<i64: 8, 128>}]} {
    %c0_i32 = arith.constant 0 : i32
    %0 = arith.cmpi eq, %arg1, %c0_i32 : i32
    %1 = arith.extui %0 : i1 to i32
    %c0_i32_0 = arith.constant 0 : i32
    %2 = arith.cmpi ne, %1, %c0_i32_0 : i32
    scf.if %2 {
      %c0_11 = arith.constant 0 : index
      %c0_12 = arith.constant 0 : index
      %15 = vector.load %arg2[%c0_11, %c0_12] : memref<8x128xbf16, #tpu.memory_space<vmem>>, vector<8x128xbf16>
      %c0_13 = arith.constant 0 : index
      %c0_14 = arith.constant 0 : index
      %16 = vector.load %arg5[%c0_13, %c0_14] : memref<8x128xbf16, #tpu.memory_space<vmem>>, vector<8x128xbf16>
      tpu.vector_store %arg5[%c0_13, %c0_14], %15 {strides = array<i32>} : memref<8x128xbf16, #tpu.memory_space<vmem>>, vector<8x128xbf16>,
    } else {
    }
    %c0 = arith.constant 0 : index
    %c0_1 = arith.constant 0 : index
    %3 = vector.load %arg5[%c0, %c0_1] : memref<8x128xbf16, #tpu.memory_space<vmem>>, vector<8x128xbf16>
    %c0_2 = arith.constant 0 : index
    %c0_3 = arith.constant 0 : index
    %c0_4 = arith.constant 0 : index
    %4 = vector.load %arg3[%c0_2, %c0_3, %c0_4] : memref<1x128x128xbf16, #tpu.memory_space<vmem>>, vector<1x128x128xbf16>
    %5 = vector.shape_cast %4 : vector<1x128x128xbf16> to vector<128x128xbf16>
    %cst = arith.constant dense<0.000000e+00> : vector<8x128xf32>
    %6 = tpu.matmul %3, %5, %cst {dimension_numbers = #tpu.dot_dimension_numbers<[1], [0], [0], [1], [0, 0, 1, 1], [], []>} : vector<8x128xbf16>, vector<128x128xbf16>, vector<8x128xf32> -> vector<8x128xf32>
    %c0_5 = arith.constant 0 : index
    %c0_6 = arith.constant 0 : index
    %c0_7 = arith.constant 0 : index
    %7 = vector.load %arg4[%c0_5, %c0_6, %c0_7] : memref<1x1x128xf32, #tpu.memory_space<vmem>>, vector<1x1x128xf32>
    %8 = vector.shape_cast %7 : vector<1x1x128xf32> to vector<1x128xf32>
    %9 = vector.broadcast %8 : vector<1x128xf32> to vector<8x128xf32>
    %10 = arith.addf %6, %9 : vector<8x128xf32>
    %cst_8 = arith.constant 0.000000e+00 : f32
    %11 = vector.broadcast %cst_8 : f32 to vector<8x128xf32>
    %12 = arith.maximumf %10, %11 : vector<8x128xf32>
    %13 = arith.truncf %12 : vector<8x128xf32> to vector<8x128xbf16>
    %c0_9 = arith.constant 0 : index
    %c0_10 = arith.constant 0 : index
    %14 = vector.load %arg5[%c0_9, %c0_10] : memref<8x128xbf16, #tpu.memory_space<vmem>>, vector<8x128xbf16>
    tpu.vector_store %arg5[%c0_9, %c0_10], %13 {strides = array<i32>} : memref<8x128xbf16, #tpu.memory_space<vmem>>, vector<8x128xbf16>,
    return
  }
  func.func @transform_0(%arg0: i32, %arg1: i32) -> (i32, i32) {
    %c0_i32 = arith.constant 0 : i32
    %c0_i32_0 = arith.constant 0 : i32
    return %arg0, %c0_i32 : i32, i32
  }
  func.func @transform_1(%arg0: i32, %arg1: i32) -> (i32, i32, i32) {
    %c0_i32 = arith.constant 0 : i32
    %c0_i32_0 = arith.constant 0 : i32
    %c0_i32_1 = arith.constant 0 : i32
    return %arg1, %c0_i32, %c0_i32_0 : i32, i32, i32
  }
  func.func @transform_2(%arg0: i32, %arg1: i32) -> (i32, i32, i32) {
    %c0_i32 = arith.constant 0 : i32
    %c0_i32_0 = arith.constant 0 : i32
    %c0_i32_1 = arith.constant 0 : i32
    return %arg1, %c0_i32, %c0_i32_0 : i32, i32, i32
  }
  func.func @transform_3(%arg0: i32, %arg1: i32) -> (i32, i32) {
    %c0_i32 = arith.constant 0 : i32
    %c0_i32_0 = arith.constant 0 : i32
    return %arg0, %c0_i32 : i32, i32
  }
}

</mosaic_0001>

<llo_original>
// kernel: _lambda_.5
$region0: #{_lambda_.5}
  #allocation0 [shape = 'u32[]', space=smem, size = 0x4, offset = 0x4, fixed_abs, tag = 'smem constant byte address 0x4 - core index']
  #allocation1 [shape = 'u32[72,128]{1,0:T(1,128)}', space=vmem, size = 0x9000, scoped, tag = 'internal scratch']
  %s0 = inlined_call_operand.vmem [shape: bf16[128,128], index: 0, kind: input, shape index: {}]
  %s1 = inlined_call_operand.vmem [shape: bf16[2,128,128], index: 1, kind: input, shape index: {}]
  %s2 = inlined_call_operand.vmem [shape: f32[2,1,128], index: 2, kind: input, shape index: {}]
  %s3 = inlined_call_operand.vmem [shape: bf16[128,128], index: 3, kind: output, shape index: {}]
  %s4 = sld [smem:[#allocation0]]
  $region49: #{_lambda_.5} parent=0
    _
  %s6 = ssub.s32 1, %s4
  %s7 = scalar_select 0, %s6, %s4
  loop: start=0, step=1, limit=4
  $region2: #{_lambda_.5} parent=0 // loop_pre_header
    _
  $region3: #{_lambda_.5} parent=0 // loop_header
    %s9 = sphi 0, %s13
    %p10 = scmp.ge.s32.totalorder %s9, 4
    %s16 = sphi 0, %s28
    %s17 = sphi 0, %s24
    %s18 = sphi 0, %s16
    %s19 = sphi 0, %s17
    %s20 = sphi 0, %s18
    %s21 = sphi 0, %s19
    %s31 = sphi 0, %s33
    %s34 = sphi 0, %s31
    %s35 = sphi 0, %s34
    %s51 = sphi 0, %s35
    %s57 = sphi 0, %s59
    %s60 = sphi 0, %s57
    %s61 = sphi 0, %s60
    %s77 = sphi 0, %s61
    %s83 = sphi 0, %s85
    %s86 = sphi 0, %s83
    %s87 = sphi 0, %s86
    %s103 = sphi 0, %s87
    %s109 = sphi 0, %s111
    %s112 = sphi 0, %s109
    %s113 = sphi 0, %s112
    %s129 = sphi 0, %s113
  $region4: #{_lambda_.5} parent=0 // loop_header_branch
    %12 = sbr.rel (%p10) target = $region8
  $region5: #{_lambda_.5} parent=0 // loop_body
    %s14 = ssub.s32 %s9, 1
    %s15 = ssub.s32 %s9, 2
    %s22 = sadd.s32 1, %s17
    %p23 = scmp.ge.s32.totalorder %s22, 2
    %s24 = scalar_select %p23, 0, %s22
    %s25 = sadd.s32 1, %s16
    %s26 = scalar_select %p23, %s25, %s16
    %p27 = scmp.ge.s32.totalorder %s26, 1
    %s28 = scalar_select %p27, 0, %s26
    %s29 = ssub.s32 %s16, %s28
    %p30 = scmp.eq.s32.totalorder %s29, 0
    %s32 = sadd.s32 %s31, 1
    %s33 = scalar_select %p30, %s31, %s32
    %p36 = pneg %p30
    %p37 = scmp.eq.s32.totalorder %s9, 1
    %p38 = por %p36, %p37
    %p39 = scmp.ne.s32.totalorder %s31, %s34
    %p40 = scmp.eq.s32.totalorder %s9, 0
    %p41 = por %p39, %p40
    %p42 = scmp.ne.s32.totalorder %s31, %s34
    %p43 = scmp.eq.s32.totalorder %s14, 1
    %p44 = por %p42, %p43
    %p45 = scmp.ne.s32.totalorder %s34, %s35
    %p46 = scmp.eq.s32.totalorder %s14, 0
    %p47 = por %p45, %p46
    %p48 = scmp.ne.s32.totalorder %s34, %s35
    %p49 = scmp.eq.s32.totalorder %s15, 1
    %p50 = por %p48, %p49
    %p52 = scmp.ne.s32.totalorder %s35, %s51
    %p53 = scmp.eq.s32.totalorder %s15, 0
    %p54 = por %p52, %p53
    %s55 = ssub.s32 %s17, %s24
    %p56 = scmp.eq.s32.totalorder %s55, 0
    %s58 = sadd.s32 %s57, 1
    %s59 = scalar_select %p56, %s57, %s58
    %p62 = pneg %p56
    %p63 = scmp.eq.s32.totalorder %s9, 1
    %p64 = por %p62, %p63
    %p65 = scmp.ne.s32.totalorder %s57, %s60
    %p66 = scmp.eq.s32.totalorder %s9, 0
    %p67 = por %p65, %p66
    %p68 = scmp.ne.s32.totalorder %s57, %s60
    %p69 = scmp.eq.s32.totalorder %s14, 1
    %p70 = por %p68, %p69
    %p71 = scmp.ne.s32.totalorder %s60, %s61
    %p72 = scmp.eq.s32.totalorder %s14, 0
    %p73 = por %p71, %p72
    %p74 = scmp.ne.s32.totalorder %s60, %s61
    %p75 = scmp.eq.s32.totalorder %s15, 1
    %p76 = por %p74, %p75
    %p78 = scmp.ne.s32.totalorder %s61, %s77
    %p79 = scmp.eq.s32.totalorder %s15, 0
    %p80 = por %p78, %p79
    %s81 = ssub.s32 %s17, %s24
    %p82 = scmp.eq.s32.totalorder %s81, 0
    %s84 = sadd.s32 %s83, 1
    %s85 = scalar_select %p82, %s83, %s84
    %p88 = pneg %p82
    %p89 = scmp.eq.s32.totalorder %s9, 1
    %p90 = por %p88, %p89
    %p91 = scmp.ne.s32.totalorder %s83, %s86
    %p92 = scmp.eq.s32.totalorder %s9, 0
    %p93 = por %p91, %p92
    %p94 = scmp.ne.s32.totalorder %s83, %s86
    %p95 = scmp.eq.s32.totalorder %s14, 1
    %p96 = por %p94, %p95
    %p97 = scmp.ne.s32.totalorder %s86, %s87
    %p98 = scmp.eq.s32.totalorder %s14, 0
    %p99 = por %p97, %p98
    %p100 = scmp.ne.s32.totalorder %s86, %s87
    %p101 = scmp.eq.s32.totalorder %s15, 1
    %p102 = por %p100, %p101
    %p104 = scmp.ne.s32.totalorder %s87, %s103
    %p105 = scmp.eq.s32.totalorder %s15, 0
    %p106 = por %p104, %p105
    %s107 = ssub.s32 %s16, %s28
    %p108 = scmp.eq.s32.totalorder %s107, 0
    %s110 = sadd.s32 %s109, 1
    %s111 = scalar_select %p108, %s109, %s110
    %p114 = pneg %p108
    %p115 = scmp.eq.s32.totalorder %s9, 1
    %p116 = por %p114, %p115
    %p117 = scmp.ne.s32.totalorder %s109, %s112
    %p118 = scmp.eq.s32.totalorder %s9, 0
    %p119 = por %p117, %p118
    %p120 = scmp.ne.s32.totalorder %s109, %s112
    %p121 = scmp.eq.s32.totalorder %s14, 1
    %p122 = por %p120, %p121
    %p123 = scmp.ne.s32.totalorder %s112, %s113
    %p124 = scmp.eq.s32.totalorder %s14, 0
    %p125 = por %p123, %p124
    %p126 = scmp.ne.s32.totalorder %s112, %s113
    %p127 = scmp.eq.s32.totalorder %s15, 1
    %p128 = por %p126, %p127
    %p130 = scmp.ne.s32.totalorder %s113, %s129
    %p131 = scmp.eq.s32.totalorder %s15, 0
    %p132 = por %p130, %p131
    %p133 = scmp.le.s32.totalorder 1, %s9
    %p134 = scmp.lt.s32.totalorder %s9, 3
    %p135 = pnand %p133, %p134
    %p136 = pneg %p135
    // Predicated region
    $region9: #{_lambda_.5} parent=5 // pred_check
      _
    $region10: #{_lambda_.5} parent=5 // pred_check_branch
      %138 = sbr.rel (%p135) target = $region12
    $region11: #{_lambda_.5} parent=5 // pred_region
      %s139 = ssub.s32 %s9, 1
      // Predicated region
      $region13: #{_lambda_.5} parent=11 // pred_check
        %p140 = pneg %p47
      $region14: #{_lambda_.5} parent=11 // pred_check_branch
        %142 = sbr.rel (%p140) target = $region16
      $region15: #{_lambda_.5} parent=11 // pred_region
        %s143 = smul.u32 16, %s18
        %p144 = scmp.lt.s32.totalorder %s143, 15
        %s145 = scalar_select %p144, %s143, 15
        %s146 = smul.addr %s145, 4
        %s147 = scalar_lea.vmem %s0, %s146
        %s148 = smul.u32 16, %s18
      $region16: #{_lambda_.5} parent=11 // pred_fallthru
        _
    $region12: #{_lambda_.5} parent=5 // pred_fallthru
      _
    %p149 = scmp.lt.s32.totalorder %s9, 2
    // Predicated region
    $region17: #{_lambda_.5} parent=5 // pred_check
      %p150 = pneg %p149
    $region18: #{_lambda_.5} parent=5 // pred_check_branch
      %152 = sbr.rel (%p150) target = $region20
    $region19: #{_lambda_.5} parent=5 // pred_region
      // Predicated region
      $region21: #{_lambda_.5} parent=19 // pred_check
        %p153 = pneg %p67
      $region22: #{_lambda_.5} parent=19 // pred_check_branch
        %155 = sbr.rel (%p153) target = $region24
      $region23: #{_lambda_.5} parent=19 // pred_region
        %p156 = scmp.lt.s32.totalorder %s17, 1
        %s157 = scalar_select %p156, %s17, 1
        %s158 = smul.addr %s157, 16
        %s159 = smul.addr %s158, 4
        %s160 = scalar_lea.vmem %s1, %s159
      $region24: #{_lambda_.5} parent=19 // pred_fallthru
        _
      // Predicated region
      $region25: #{_lambda_.5} parent=19 // pred_check
        %p161 = pneg %p93
      $region26: #{_lambda_.5} parent=19 // pred_check_branch
        %163 = sbr.rel (%p161) target = $region28
      $region27: #{_lambda_.5} parent=19 // pred_region
        %p164 = scmp.lt.s32.totalorder %s17, 1
        %s165 = scalar_select %p164, %s17, 1
        %s166 = scalar_lea.vmem %s2, %s165
      $region28: #{_lambda_.5} parent=19 // pred_fallthru
        _
    $region20: #{_lambda_.5} parent=5 // pred_fallthru
      _
    %p167 = scmp.le.s32.totalorder 1, %s9
    %p168 = scmp.lt.s32.totalorder %s9, 3
    %p169 = pnand %p167, %p168
    %p170 = pneg %p169
    // Predicated region
    $region29: #{_lambda_.5} parent=5 // pred_check
      _
    $region30: #{_lambda_.5} parent=5 // pred_check_branch
      %172 = sbr.rel (%p169) target = $region32
    $region31: #{_lambda_.5} parent=5 // pred_region
      %s173 = ssub.s32 %s9, 1
      %s174 = smul.u32 16, %s18
      %p175 = scmp.lt.s32.totalorder %s174, 15
      %s176 = scalar_select %p175, %s174, 15
      %s177 = smul.addr %s176, 4
      %s178 = scalar_lea.vmem %s0, %s177
      %p179 = pneg %p47
      %p180 = pneg %p44
      %p181 = scmp.lt.s32.totalorder %s19, 1
      %s182 = scalar_select %p181, %s19, 1
      %s183 = smul.addr %s182, 16
      %s184 = smul.addr %s183, 4
      %s185 = scalar_lea.vmem %s1, %s184
      %p186 = pneg %p73
      %p187 = pneg %p70
      %p188 = scmp.lt.s32.totalorder %s19, 1
      %s189 = scalar_select %p188, %s19, 1
      %s190 = scalar_lea.vmem %s2, %s189
      %p191 = pneg %p99
      %p192 = pneg %p96
      %p193 = pneg %p125
      %p194 = pneg %p122
      %s195 = smul.u32 16, %s18
      %p196 = scmp.lt.s32.totalorder %s195, 15
      %s197 = scalar_select %p196, %s195, 15
      %s198 = smul.addr %s197, 4
      %s199 = scalar_lea.vmem %s3, %s198
      %s200 = smul.u32 16, %s18
      %p201 = scmp.lt.s32.totalorder %s200, 15
      %s202 = scalar_select %p201, %s200, 15
      %s203 = smul.addr %s202, 4
      %s204 = scalar_lea.vmem %s0, %s203
      %s205 = smul.u32 16, %s18
      %p206 = scmp.lt.s32.totalorder %s19, 1
      %s207 = scalar_select %p206, %s19, 1
      %s208 = smul.addr %s207, 16
      %s209 = smul.addr %s208, 4
      %s210 = scalar_lea.vmem %s1, %s209
      %p211 = scmp.lt.s32.totalorder %s19, 1
      %s212 = scalar_select %p211, %s19, 1
      %s213 = scalar_lea.vmem %s2, %s212
      %s214 = smul.u32 16, %s18
      %p215 = scmp.lt.s32.totalorder %s214, 15
      %s216 = scalar_select %p215, %s214, 15
      %s217 = smul.addr %s216, 4
      %s218 = scalar_lea.vmem %s3, %s217
      %s219 = smul.u32 16, %s18
      %p220 = scmp.eq.s32.totalorder %s19, 0
      // Predicated region
      $region33: #{_lambda_.5} parent=31 // pred_check
        %p221 = pneg %p220
      $region34: #{_lambda_.5} parent=31 // pred_check_branch
        %223 = sbr.rel (%p221) target = $region36
      $region35: #{_lambda_.5} parent=31 // pred_region
        %v224 = vld [vmem:[%s204] sm:$0xf]
        %v225 = vld [vmem:[%s204 + $0x4] sm:$0xf]
        %v226 = vld [vmem:[%s204 + $0x8] sm:$0xf]
        %v227 = vld [vmem:[%s204 + $0xc] sm:$0xf]
        %v228 = vld [vmem:[%s204 + $0x10] sm:$0xf]
        %v229 = vld [vmem:[%s204 + $0x14] sm:$0xf]
        %v230 = vld [vmem:[%s204 + $0x18] sm:$0xf]
        %v231 = vld [vmem:[%s204 + $0x1c] sm:$0xf]
        %v232 = vld [vmem:[%s204 + $0x20] sm:$0xf]
        %v233 = vld [vmem:[%s204 + $0x24] sm:$0xf]
        %v234 = vld [vmem:[%s204 + $0x28] sm:$0xf]
        %v235 = vld [vmem:[%s204 + $0x2c] sm:$0xf]
        %v236 = vld [vmem:[%s204 + $0x30] sm:$0xf]
        %v237 = vld [vmem:[%s204 + $0x34] sm:$0xf]
        %v238 = vld [vmem:[%s204 + $0x38] sm:$0xf]
        %v239 = vld [vmem:[%s204 + $0x3c] sm:$0xf]
        %240 = vst [vmem:[%s218] sm:$0xf] %v224
        %241 = vst [vmem:[%s218 + $0x4] sm:$0xf] %v225
        %242 = vst [vmem:[%s218 + $0x8] sm:$0xf] %v226
        %243 = vst [vmem:[%s218 + $0xc] sm:$0xf] %v227
        %244 = vst [vmem:[%s218 + $0x10] sm:$0xf] %v228
        %245 = vst [vmem:[%s218 + $0x14] sm:$0xf] %v229
        %246 = vst [vmem:[%s218 + $0x18] sm:$0xf] %v230
        %247 = vst [vmem:[%s218 + $0x1c] sm:$0xf] %v231
        %248 = vst [vmem:[%s218 + $0x20] sm:$0xf] %v232
        %249 = vst [vmem:[%s218 + $0x24] sm:$0xf] %v233
        %250 = vst [vmem:[%s218 + $0x28] sm:$0xf] %v234
        %251 = vst [vmem:[%s218 + $0x2c] sm:$0xf] %v235
        %252 = vst [vmem:[%s218 + $0x30] sm:$0xf] %v236
        %253 = vst [vmem:[%s218 + $0x34] sm:$0xf] %v237
        %254 = vst [vmem:[%s218 + $0x38] sm:$0xf] %v238
        %255 = vst [vmem:[%s218 + $0x3c] sm:$0xf] %v239
      $region36: #{_lambda_.5} parent=31 // pred_fallthru
        _
      %v256 = vld [vmem:[%s218] sm:$0xf]
      %v257 = vld [vmem:[%s218 + $0x4] sm:$0xf]
      %v258 = vld [vmem:[%s218 + $0x8] sm:$0xf]
      %v259 = vld [vmem:[%s218 + $0xc] sm:$0xf]
      %v260 = vld [vmem:[%s218 + $0x10] sm:$0xf]
      %v261 = vld [vmem:[%s218 + $0x14] sm:$0xf]
      %v262 = vld [vmem:[%s218 + $0x18] sm:$0xf]
      %v263 = vld [vmem:[%s218 + $0x1c] sm:$0xf]
      %v264 = vld [vmem:[%s218 + $0x20] sm:$0xf]
      %v265 = vld [vmem:[%s218 + $0x24] sm:$0xf]
      %v266 = vld [vmem:[%s218 + $0x28] sm:$0xf]
      %v267 = vld [vmem:[%s218 + $0x2c] sm:$0xf]
      %v268 = vld [vmem:[%s218 + $0x30] sm:$0xf]
      %v269 = vld [vmem:[%s218 + $0x34] sm:$0xf]
      %v270 = vld [vmem:[%s218 + $0x38] sm:$0xf]
      %v271 = vld [vmem:[%s218 + $0x3c] sm:$0xf]
      %v272 = vld [vmem:[%s210] sm:$0xf]
      %v273 = vld [vmem:[%s210 + $0x4] sm:$0xf]
      %v274 = vld [vmem:[%s210 + $0x8] sm:$0xf]
      %v275 = vld [vmem:[%s210 + $0xc] sm:$0xf]
      %v276 = vld [vmem:[%s210 + $0x10] sm:$0xf]
      %v277 = vld [vmem:[%s210 + $0x14] sm:$0xf]
      %v278 = vld [vmem:[%s210 + $0x18] sm:$0xf]
      %v279 = vld [vmem:[%s210 + $0x1c] sm:$0xf]
      %v280 = vld [vmem:[%s210 + $0x20] sm:$0xf]
      %v281 = vld [vmem:[%s210 + $0x24] sm:$0xf]
      %v282 = vld [vmem:[%s210 + $0x28] sm:$0xf]
      %v283 = vld [vmem:[%s210 + $0x2c] sm:$0xf]
      %v284 = vld [vmem:[%s210 + $0x30] sm:$0xf]
      %v285 = vld [vmem:[%s210 + $0x34] sm:$0xf]
      %v286 = vld [vmem:[%s210 + $0x38] sm:$0xf]
      %v287 = vld [vmem:[%s210 + $0x3c] sm:$0xf]
      %v288 = vld [vmem:[%s213] sm:$0x1]
      %v290 = vperm.slane %v288, 0
      %v308 = vunpack.c.l.b16 %v256
      %v309 = vunpack.c.l.b16 %v257
      %v310 = vunpack.c.l.b16 %v258
      %v311 = vunpack.c.l.b16 %v259
      %v312 = vunpack.c.l.b16 %v260
      %v313 = vunpack.c.l.b16 %v261
      %v314 = vunpack.c.l.b16 %v262
      %v315 = vunpack.c.l.b16 %v263
      %v316 = vunpack.c.l.b16 %v264
      %v317 = vunpack.c.l.b16 %v265
      %v318 = vunpack.c.l.b16 %v266
      %v319 = vunpack.c.l.b16 %v267
      %v320 = vunpack.c.l.b16 %v268
      %v321 = vunpack.c.l.b16 %v269
      %v322 = vunpack.c.l.b16 %v270
      %v323 = vunpack.c.l.b16 %v271
      %v324 = vpack.c.b16 %v309, %v308
      %v325 = vpack.c.b16 %v311, %v310
      %v326 = vpack.c.b16 %v313, %v312
      %v327 = vpack.c.b16 %v315, %v314
      %v328 = vpack.c.b16 %v317, %v316
      %v329 = vpack.c.b16 %v319, %v318
      %v330 = vpack.c.b16 %v321, %v320
      %v331 = vpack.c.b16 %v323, %v322
      %v356 = vunpack.c.l.b16 %v272
      %v357 = vunpack.c.l.b16 %v273
      %v358 = vunpack.c.l.b16 %v274
      %v359 = vunpack.c.l.b16 %v275
      %v360 = vunpack.c.l.b16 %v276
      %v361 = vunpack.c.l.b16 %v277
      %v362 = vunpack.c.l.b16 %v278
      %v363 = vunpack.c.l.b16 %v279
      %v364 = vunpack.c.l.b16 %v280
      %v365 = vunpack.c.l.b16 %v281
      %v366 = vunpack.c.l.b16 %v282
      %v367 = vunpack.c.l.b16 %v283
      %v368 = vunpack.c.l.b16 %v284
      %v369 = vunpack.c.l.b16 %v285
      %v370 = vunpack.c.l.b16 %v286
      %v371 = vunpack.c.l.b16 %v287
      %v372 = vpack.c.b16 %v357, %v356
      %v373 = vpack.c.b16 %v359, %v358
      %v374 = vpack.c.b16 %v361, %v360
      %v375 = vpack.c.b16 %v363, %v362
      %v376 = vpack.c.b16 %v365, %v364
      %v377 = vpack.c.b16 %v367, %v366
      %v378 = vpack.c.b16 %v369, %v368
      %v379 = vpack.c.b16 %v371, %v370
      %388 = vmatpush.bf16.msra.mxu0 %v379
      %389 = vmatpush.bf16.msra.mxu0 %v378
      %390 = vmatpush.bf16.msra.mxu0 %v377
      %391 = vmatpush.bf16.msra.mxu0 %v376
      %392 = vmatpush.bf16.msra.mxu0 %v375
      %393 = vmatpush.bf16.msra.mxu0 %v374
      %394 = vmatpush.bf16.msra.mxu0 %v373
      %395 = vmatpush.bf16.msra.mxu0 %v372
      %396 = vmatmul.bf16.gmra.mxu0 %v324
      %v397 = vpop.f32.mrf.mxu0
      %v398 = vadd.f32 %v290, %v397
      %v399 = vpop.f32.mrf.mxu0
      %v400 = vadd.f32 %v290, %v399
      %401 = vmatmul.bf16.gmra.mxu0 %v325
      %v402 = vpop.f32.mrf.mxu0
      %v403 = vadd.f32 %v290, %v402
      %v404 = vpop.f32.mrf.mxu0
      %v405 = vadd.f32 %v290, %v404
      %406 = vmatmul.bf16.gmra.mxu0 %v326
      %v407 = vpop.f32.mrf.mxu0
      %v408 = vadd.f32 %v290, %v407
      %v409 = vpop.f32.mrf.mxu0
      %v410 = vadd.f32 %v290, %v409
      %411 = vmatmul.bf16.gmra.mxu0 %v327
      %v412 = vpop.f32.mrf.mxu0
      %v413 = vadd.f32 %v290, %v412
      %v414 = vpop.f32.mrf.mxu0
      %v415 = vadd.f32 %v290, %v414
      %416 = vmatmul.bf16.gmra.mxu0 %v328
      %v417 = vpop.f32.mrf.mxu0
      %v418 = vadd.f32 %v290, %v417
      %v419 = vpop.f32.mrf.mxu0
      %v420 = vadd.f32 %v290, %v419
      %421 = vmatmul.bf16.gmra.mxu0 %v329
      %v422 = vpop.f32.mrf.mxu0
      %v423 = vadd.f32 %v290, %v422
      %v424 = vpop.f32.mrf.mxu0
      %v425 = vadd.f32 %v290, %v424
      %426 = vmatmul.bf16.gmra.mxu0 %v330
      %v427 = vpop.f32.mrf.mxu0
      %v428 = vadd.f32 %v290, %v427
      %v429 = vpop.f32.mrf.mxu0
      %v430 = vadd.f32 %v290, %v429
      %431 = vmatmul.bf16.gmra.mxu0 %v331
      %v432 = vpop.f32.mrf.mxu0
      %v433 = vadd.f32 %v290, %v432
      %v434 = vpop.f32.mrf.mxu0
      %v435 = vadd.f32 %v290, %v434
      %436 = vdwg.mxu0
      %v437 = vmax.f32 %v398, 0.0
      %v438 = vmax.f32 %v400, 0.0
      %v439 = vmax.f32 %v403, 0.0
      %v440 = vmax.f32 %v405, 0.0
      %v441 = vmax.f32 %v408, 0.0
      %v442 = vmax.f32 %v410, 0.0
      %v443 = vmax.f32 %v413, 0.0
      %v444 = vmax.f32 %v415, 0.0
      %v445 = vmax.f32 %v418, 0.0
      %v446 = vmax.f32 %v420, 0.0
      %v447 = vmax.f32 %v423, 0.0
      %v448 = vmax.f32 %v425, 0.0
      %v449 = vmax.f32 %v428, 0.0
      %v450 = vmax.f32 %v430, 0.0
      %v451 = vmax.f32 %v433, 0.0
      %v452 = vmax.f32 %v435, 0.0
      %v453 = vpack.c.bf16 %v437, %v437
      %v454 = vpack.c.bf16 %v438, %v438
      %v455 = vpack.c.bf16 %v439, %v439
      %v456 = vpack.c.bf16 %v440, %v440
      %v457 = vpack.c.bf16 %v441, %v441
      %v458 = vpack.c.bf16 %v442, %v442
      %v459 = vpack.c.bf16 %v443, %v443
      %v460 = vpack.c.bf16 %v444, %v444
      %v461 = vpack.c.bf16 %v445, %v445
      %v462 = vpack.c.bf16 %v446, %v446
      %v463 = vpack.c.bf16 %v447, %v447
      %v464 = vpack.c.bf16 %v448, %v448
      %v465 = vpack.c.bf16 %v449, %v449
      %v466 = vpack.c.bf16 %v450, %v450
      %v467 = vpack.c.bf16 %v451, %v451
      %v468 = vpack.c.bf16 %v452, %v452
      %469 = vst [vmem:[%s218] sm:$0xf] %v453
      %470 = vst [vmem:[%s218 + $0x4] sm:$0xf] %v454
      %471 = vst [vmem:[%s218 + $0x8] sm:$0xf] %v455
      %472 = vst [vmem:[%s218 + $0xc] sm:$0xf] %v456
      %473 = vst [vmem:[%s218 + $0x10] sm:$0xf] %v457
      %474 = vst [vmem:[%s218 + $0x14] sm:$0xf] %v458
      %475 = vst [vmem:[%s218 + $0x18] sm:$0xf] %v459
      %476 = vst [vmem:[%s218 + $0x1c] sm:$0xf] %v460
      %477 = vst [vmem:[%s218 + $0x20] sm:$0xf] %v461
      %478 = vst [vmem:[%s218 + $0x24] sm:$0xf] %v462
      %479 = vst [vmem:[%s218 + $0x28] sm:$0xf] %v463
      %480 = vst [vmem:[%s218 + $0x2c] sm:$0xf] %v464
      %481 = vst [vmem:[%s218 + $0x30] sm:$0xf] %v465
      %482 = vst [vmem:[%s218 + $0x34] sm:$0xf] %v466
      %483 = vst [vmem:[%s218 + $0x38] sm:$0xf] %v467
      %484 = vst [vmem:[%s218 + $0x3c] sm:$0xf] %v468
      %s485 = smul.u32 16, %s18
      %p486 = scmp.lt.s32.totalorder %s485, 15
      %s487 = scalar_select %p486, %s485, 15
      %s488 = smul.addr %s487, 4
      %s489 = scalar_lea.vmem %s3, %s488
      // Predicated region
      $region37: #{_lambda_.5} parent=31 // pred_check
        %p490 = pneg %p122
      $region38: #{_lambda_.5} parent=31 // pred_check_branch
        %492 = sbr.rel (%p490) target = $region40
      $region39: #{_lambda_.5} parent=31 // pred_region
        %s493 = smul.u32 16, %s18
      $region40: #{_lambda_.5} parent=31 // pred_fallthru
        _
      // Predicated region
      $region41: #{_lambda_.5} parent=31 // pred_check
        %p494 = pneg %p122
      $region42: #{_lambda_.5} parent=31 // pred_check_branch
        %496 = sbr.rel (%p494) target = $region44
      $region43: #{_lambda_.5} parent=31 // pred_region
        %s497 = smul.u32 16, %s18
        %p498 = scmp.lt.s32.totalorder %s497, 15
        %s499 = scalar_select %p498, %s497, 15
        %s500 = smul.addr %s499, 4
        %s501 = scalar_lea.vmem %s3, %s500
      $region44: #{_lambda_.5} parent=31 // pred_fallthru
        _
    $region32: #{_lambda_.5} parent=5 // pred_fallthru
      _
    %p502 = scmp.le.s32.totalorder 2, %s9
    // Predicated region
    $region45: #{_lambda_.5} parent=5 // pred_check
      %p503 = pneg %p502
    $region46: #{_lambda_.5} parent=5 // pred_check_branch
      %505 = sbr.rel (%p503) target = $region48
    $region47: #{_lambda_.5} parent=5 // pred_region
      %s506 = ssub.s32 %s9, 2
    $region48: #{_lambda_.5} parent=5 // pred_fallthru
      _
  $region6: #{_lambda_.5} parent=0 // loop_footer
    %s13 = sadd.s32 1, %s9
  $region7: #{_lambda_.5} parent=0 // loop_footer_branch
    %8 = sbr.rel target = $region3
  $region8: #{_lambda_.5} parent=0 // loop_exit
    _

// kernel: _lambda_.4
$region0: #{_lambda_.4}
  #allocation0 [shape = 'u32[]', space=smem, size = 0x4, offset = 0x4, fixed_abs, tag = 'smem constant byte address 0x4 - core index']
  #allocation1 [shape = 'u32[72,128]{1,0:T(1,128)}', space=vmem, size = 0x9000, scoped, tag = 'internal scratch']
  %s0 = inlined_call_operand.vmem [shape: bf16[512,160], index: 0, kind: input, shape index: {}]
  %s1 = inlined_call_operand.vmem [shape: bf16[160,128], index: 1, kind: input, shape index: {}]
  %s2 = inlined_call_operand.vmem [shape: f32[1,128], index: 2, kind: input, shape index: {}]
  %s3 = inlined_call_operand.vmem [shape: bf16[512,128], index: 3, kind: output, shape index: {}]
  %s4 = sld [smem:[#allocation0]]
  $region22: #{_lambda_.4} parent=0
    _
  %s6 = ssub.s32 1, %s4
  %s7 = scalar_select 0, %s6, %s4
  // Predicated region
  $region2: #{_lambda_.4} parent=0 // pred_check
    _
  $region3: #{_lambda_.4} parent=0 // pred_check_branch
    %9 = sbr.rel (0) target = $region5
  $region4: #{_lambda_.4} parent=0 // pred_region
    _
  $region5: #{_lambda_.4} parent=0 // pred_fallthru
    _
  // Predicated region
  $region6: #{_lambda_.4} parent=0 // pred_check
    _
  $region7: #{_lambda_.4} parent=0 // pred_check_branch
    %11 = sbr.rel (0) target = $region9
  $region8: #{_lambda_.4} parent=0 // pred_region
    _
  $region9: #{_lambda_.4} parent=0 // pred_fallthru
    _
  // Predicated region
  $region10: #{_lambda_.4} parent=0 // pred_check
    _
  $region11: #{_lambda_.4} parent=0 // pred_check_branch
    %13 = sbr.rel (0) target = $region13
  $region12: #{_lambda_.4} parent=0 // pred_region
    _
  $region13: #{_lambda_.4} parent=0 // pred_fallthru
    _
  %v15 = vld [vmem:[%s0] sm:$0xff]
  %v16 = vld [vmem:[%s0 + $0x8] sm:$0xff]
  %v17 = vld [vmem:[%s0 + $0x10] sm:$0xff]
  %v18 = vld [vmem:[%s0 + $0x18] sm:$0xff]
  %v19 = vld [vmem:[%s0 + $0x20] sm:$0xff]
  %v20 = vld [vmem:[%s0 + $0x28] sm:$0xff]
  %v21 = vld [vmem:[%s0 + $0x30] sm:$0xff]
  %v22 = vld [vmem:[%s0 + $0x38] sm:$0xff]
  %v23 = vld [vmem:[%s0 + $0x40] sm:$0xff]
  %v24 = vld [vmem:[%s0 + $0x48] sm:$0xff]
  %v25 = vld [vmem:[%s0 + $0x50] sm:$0xff]
  %v26 = vld [vmem:[%s0 + $0x58] sm:$0xff]
  %v27 = vld [vmem:[%s0 + $0x60] sm:$0xff]
  %v28 = vld [vmem:[%s0 + $0x68] sm:$0xff]
  %v29 = vld [vmem:[%s0 + $0x70] sm:$0xff]
  %v30 = vld [vmem:[%s0 + $0x78] sm:$0xff]
  %v31 = vld [vmem:[%s0 + $0x80] sm:$0xff]
  %v32 = vld [vmem:[%s0 + $0x88] sm:$0xff]
  %v33 = vld [vmem:[%s0 + $0x90] sm:$0xff]
  %v34 = vld [vmem:[%s0 + $0x98] sm:$0xff]
  %v35 = vld [vmem:[%s0 + $0xa0] sm:$0xff]
  %v36 = vld [vmem:[%s0 + $0xa8] sm:$0xff]
  %v37 = vld [vmem:[%s0 + $0xb0] sm:$0xff]
  %v38 = vld [vmem:[%s0 + $0xb8] sm:$0xff]
  %v39 = vld [vmem:[%s0 + $0xc0] sm:$0xff]
  %v40 = vld [vmem:[%s0 + $0xc8] sm:$0xff]
  %v41 = vld [vmem:[%s0 + $0xd0] sm:$0xff]
  %v42 = vld [vmem:[%s0 + $0xd8] sm:$0xff]
  %v43 = vld [vmem:[%s0 + $0xe0] sm:$0xff]
  %v44 = vld [vmem:[%s0 + $0xe8] sm:$0xff]
  %v45 = vld [vmem:[%s0 + $0xf0] sm:$0xff]
  %v46 = vld [vmem:[%s0 + $0xf8] sm:$0xff]
  %v47 = vld [vmem:[%s0 + $0x100] sm:$0xff]
  %v48 = vld [vmem:[%s0 + $0x108] sm:$0xff]
  %v49 = vld [vmem:[%s0 + $0x110] sm:$0xff]
  %v50 = vld [vmem:[%s0 + $0x118] sm:$0xff]
  %v51 = vld [vmem:[%s0 + $0x120] sm:$0xff]
  %v52 = vld [vmem:[%s0 + $0x128] sm:$0xff]
  %v53 = vld [vmem:[%s0 + $0x130] sm:$0xff]
  %v54 = vld [vmem:[%s0 + $0x138] sm:$0xff]
  %v55 = vld [vmem:[%s0 + $0x140] sm:$0xff]
  %v56 = vld [vmem:[%s0 + $0x148] sm:$0xff]
  %v57 = vld [vmem:[%s0 + $0x150] sm:$0xff]
  %v58 = vld [vmem:[%s0 + $0x158] sm:$0xff]
  %v59 = vld [vmem:[%s0 + $0x160] sm:$0xff]
  %v60 = vld [vmem:[%s0 + $0x168] sm:$0xff]
  %v61 = vld [vmem:[%s0 + $0x170] sm:$0xff]
  %v62 = vld [vmem:[%s0 + $0x178] sm:$0xff]
  %v63 = vld [vmem:[%s0 + $0x180] sm:$0xff]
  %v64 = vld [vmem:[%s0 + $0x188] sm:$0xff]
  %v65 = vld [vmem:[%s0 + $0x190] sm:$0xff]
  %v66 = vld [vmem:[%s0 + $0x198] sm:$0xff]
  %v67 = vld [vmem:[%s0 + $0x1a0] sm:$0xff]
  %v68 = vld [vmem:[%s0 + $0x1a8] sm:$0xff]
  %v69 = vld [vmem:[%s0 + $0x1b0] sm:$0xff]
  %v70 = vld [vmem:[%s0 + $0x1b8] sm:$0xff]
  %v71 = vld [vmem:[%s0 + $0x1c0] sm:$0xff]
  %v72 = vld [vmem:[%s0 + $0x1c8] sm:$0xff]
  %v73 = vld [vmem:[%s0 + $0x1d0] sm:$0xff]
  %v74 = vld [vmem:[%s0 + $0x1d8] sm:$0xff]
  %v75 = vld [vmem:[%s0 + $0x1e0] sm:$0xff]
  %v76 = vld [vmem:[%s0 + $0x1e8] sm:$0xff]
  %v77 = vld [vmem:[%s0 + $0x1f0] sm:$0xff]
  %v78 = vld [vmem:[%s0 + $0x1f8] sm:$0xff]
  %v79 = vld [vmem:[%s1] sm:$0xf]
  %v80 = vld [vmem:[%s1 + $0x4] sm:$0xf]
  %v81 = vld [vmem:[%s1 + $0x8] sm:$0xf]
  %v82 = vld [vmem:[%s1 + $0xc] sm:$0xf]
  %v83 = vld [vmem:[%s1 + $0x10] sm:$0xf]
  %v84 = vld [vmem:[%s1 + $0x14] sm:$0xf]
  %v85 = vld [vmem:[%s1 + $0x18] sm:$0xf]
  %v86 = vld [vmem:[%s1 + $0x1c] sm:$0xf]
  %v87 = vld [vmem:[%s1 + $0x20] sm:$0xf]
  %v88 = vld [vmem:[%s1 + $0x24] sm:$0xf]
  %v89 = vld [vmem:[%s1 + $0x28] sm:$0xf]
  %v90 = vld [vmem:[%s1 + $0x2c] sm:$0xf]
  %v91 = vld [vmem:[%s1 + $0x30] sm:$0xf]
  %v92 = vld [vmem:[%s1 + $0x34] sm:$0xf]
  %v93 = vld [vmem:[%s1 + $0x38] sm:$0xf]
  %v94 = vld [vmem:[%s1 + $0x3c] sm:$0xf]
  %v95 = vld [vmem:[%s1 + $0x40] sm:$0xf]
  %v96 = vld [vmem:[%s1 + $0x44] sm:$0xf]
  %v97 = vld [vmem:[%s1 + $0x48] sm:$0xf]
  %v98 = vld [vmem:[%s1 + $0x4c] sm:$0xf]
  %v99 = vld [vmem:[%s2] sm:$0x1]
  %v101 = vperm.slane %v99, 0
  %v167 = vunpack.c.l.b16 %v15
  %v168 = vunpack.c.h.b16 %v15
  %v169 = vunpack.c.l.b16 %v16
  %v170 = vunpack.c.h.b16 %v16
  %v171 = vunpack.c.l.b16 %v17
  %v172 = vunpack.c.h.b16 %v17
  %v173 = vunpack.c.l.b16 %v18
  %v174 = vunpack.c.h.b16 %v18
  %v175 = vunpack.c.l.b16 %v19
  %v176 = vunpack.c.h.b16 %v19
  %v177 = vunpack.c.l.b16 %v20
  %v178 = vunpack.c.h.b16 %v20
  %v179 = vunpack.c.l.b16 %v21
  %v180 = vunpack.c.h.b16 %v21
  %v181 = vunpack.c.l.b16 %v22
  %v182 = vunpack.c.h.b16 %v22
  %v183 = vunpack.c.l.b16 %v23
  %v184 = vunpack.c.h.b16 %v23
  %v185 = vunpack.c.l.b16 %v24
  %v186 = vunpack.c.h.b16 %v24
  %v187 = vunpack.c.l.b16 %v25
  %v188 = vunpack.c.h.b16 %v25
  %v189 = vunpack.c.l.b16 %v26
  %v190 = vunpack.c.h.b16 %v26
  %v191 = vunpack.c.l.b16 %v27
  %v192 = vunpack.c.h.b16 %v27
  %v193 = vunpack.c.l.b16 %v28
  %v194 = vunpack.c.h.b16 %v28
  %v195 = vunpack.c.l.b16 %v29
  %v196 = vunpack.c.h.b16 %v29
  %v197 = vunpack.c.l.b16 %v30
  %v198 = vunpack.c.h.b16 %v30
  %v199 = vunpack.c.l.b16 %v31
  %v200 = vunpack.c.h.b16 %v31
  %v201 = vunpack.c.l.b16 %v32
  %v202 = vunpack.c.h.b16 %v32
  %v203 = vunpack.c.l.b16 %v33
  %v204 = vunpack.c.h.b16 %v33
  %v205 = vunpack.c.l.b16 %v34
  %v206 = vunpack.c.h.b16 %v34
  %v207 = vunpack.c.l.b16 %v35
  %v208 = vunpack.c.h.b16 %v35
  %v209 = vunpack.c.l.b16 %v36
  %v210 = vunpack.c.h.b16 %v36
  %v211 = vunpack.c.l.b16 %v37
  %v212 = vunpack.c.h.b16 %v37
  %v213 = vunpack.c.l.b16 %v38
  %v214 = vunpack.c.h.b16 %v38
  %v215 = vunpack.c.l.b16 %v39
  %v216 = vunpack.c.h.b16 %v39
  %v217 = vunpack.c.l.b16 %v40
  %v218 = vunpack.c.h.b16 %v40
  %v219 = vunpack.c.l.b16 %v41
  %v220 = vunpack.c.h.b16 %v41
  %v221 = vunpack.c.l.b16 %v42
  %v222 = vunpack.c.h.b16 %v42
  %v223 = vunpack.c.l.b16 %v43
  %v224 = vunpack.c.h.b16 %v43
  %v225 = vunpack.c.l.b16 %v44
  %v226 = vunpack.c.h.b16 %v44
  %v227 = vunpack.c.l.b16 %v45
  %v228 = vunpack.c.h.b16 %v45
  %v229 = vunpack.c.l.b16 %v46
  %v230 = vunpack.c.h.b16 %v46
  %v231 = vunpack.c.l.b16 %v47
  %v232 = vunpack.c.h.b16 %v47
  %v233 = vunpack.c.l.b16 %v48
  %v234 = vunpack.c.h.b16 %v48
  %v235 = vunpack.c.l.b16 %v49
  %v236 = vunpack.c.h.b16 %v49
  %v237 = vunpack.c.l.b16 %v50
  %v238 = vunpack.c.h.b16 %v50
  %v239 = vunpack.c.l.b16 %v51
  %v240 = vunpack.c.h.b16 %v51
  %v241 = vunpack.c.l.b16 %v52
  %v242 = vunpack.c.h.b16 %v52
  %v243 = vunpack.c.l.b16 %v53
  %v244 = vunpack.c.h.b16 %v53
  %v245 = vunpack.c.l.b16 %v54
  %v246 = vunpack.c.h.b16 %v54
  %v247 = vunpack.c.l.b16 %v55
  %v248 = vunpack.c.h.b16 %v55
  %v249 = vunpack.c.l.b16 %v56
  %v250 = vunpack.c.h.b16 %v56
  %v251 = vunpack.c.l.b16 %v57
  %v252 = vunpack.c.h.b16 %v57
  %v253 = vunpack.c.l.b16 %v58
  %v254 = vunpack.c.h.b16 %v58
  %v255 = vunpack.c.l.b16 %v59
  %v256 = vunpack.c.h.b16 %v59
  %v257 = vunpack.c.l.b16 %v60
  %v258 = vunpack.c.h.b16 %v60
  %v259 = vunpack.c.l.b16 %v61
  %v260 = vunpack.c.h.b16 %v61
  %v261 = vunpack.c.l.b16 %v62
  %v262 = vunpack.c.h.b16 %v62
  %v263 = vunpack.c.l.b16 %v63
  %v264 = vunpack.c.h.b16 %v63
  %v265 = vunpack.c.l.b16 %v64
  %v266 = vunpack.c.h.b16 %v64
  %v267 = vunpack.c.l.b16 %v65
  %v268 = vunpack.c.h.b16 %v65
  %v269 = vunpack.c.l.b16 %v66
  %v270 = vunpack.c.h.b16 %v66
  %v271 = vunpack.c.l.b16 %v67
  %v272 = vunpack.c.h.b16 %v67
  %v273 = vunpack.c.l.b16 %v68
  %v274 = vunpack.c.h.b16 %v68
  %v275 = vunpack.c.l.b16 %v69
  %v276 = vunpack.c.h.b16 %v69
  %v277 = vunpack.c.l.b16 %v70
  %v278 = vunpack.c.h.b16 %v70
  %v279 = vunpack.c.l.b16 %v71
  %v280 = vunpack.c.h.b16 %v71
  %v281 = vunpack.c.l.b16 %v72
  %v282 = vunpack.c.h.b16 %v72
  %v283 = vunpack.c.l.b16 %v73
  %v284 = vunpack.c.h.b16 %v73
  %v285 = vunpack.c.l.b16 %v74
  %v286 = vunpack.c.h.b16 %v74
  %v287 = vunpack.c.l.b16 %v75
  %v288 = vunpack.c.h.b16 %v75
  %v289 = vunpack.c.l.b16 %v76
  %v290 = vunpack.c.h.b16 %v76
  %v291 = vunpack.c.l.b16 %v77
  %v292 = vunpack.c.h.b16 %v77
  %v293 = vunpack.c.l.b16 %v78
  %v294 = vunpack.c.h.b16 %v78
  %v295 = vpack.c.b16 %v169, %v167
  %v296 = vpack.c.b16 %v170, %v168
  %v297 = vpack.c.b16 %v173, %v171
  %v298 = vpack.c.b16 %v174, %v172
  %v299 = vpack.c.b16 %v177, %v175
  %v300 = vpack.c.b16 %v178, %v176
  %v301 = vpack.c.b16 %v181, %v179
  %v302 = vpack.c.b16 %v182, %v180
  %v303 = vpack.c.b16 %v185, %v183
  %v304 = vpack.c.b16 %v186, %v184
  %v305 = vpack.c.b16 %v189, %v187
  %v306 = vpack.c.b16 %v190, %v188
  %v307 = vpack.c.b16 %v193, %v191
  %v308 = vpack.c.b16 %v194, %v192
  %v309 = vpack.c.b16 %v197, %v195
  %v310 = vpack.c.b16 %v198, %v196
  %v311 = vpack.c.b16 %v201, %v199
  %v312 = vpack.c.b16 %v202, %v200
  %v313 = vpack.c.b16 %v205, %v203
  %v314 = vpack.c.b16 %v206, %v204
  %v315 = vpack.c.b16 %v209, %v207
  %v316 = vpack.c.b16 %v210, %v208
  %v317 = vpack.c.b16 %v213, %v211
  %v318 = vpack.c.b16 %v214, %v212
  %v319 = vpack.c.b16 %v217, %v215
  %v320 = vpack.c.b16 %v218, %v216
  %v321 = vpack.c.b16 %v221, %v219
  %v322 = vpack.c.b16 %v222, %v220
  %v323 = vpack.c.b16 %v225, %v223
  %v324 = vpack.c.b16 %v226, %v224
  %v325 = vpack.c.b16 %v229, %v227
  %v326 = vpack.c.b16 %v230, %v228
  %v327 = vpack.c.b16 %v233, %v231
  %v328 = vpack.c.b16 %v234, %v232
  %v329 = vpack.c.b16 %v237, %v235
  %v330 = vpack.c.b16 %v238, %v236
  %v331 = vpack.c.b16 %v241, %v239
  %v332 = vpack.c.b16 %v242, %v240
  %v333 = vpack.c.b16 %v245, %v243
  %v334 = vpack.c.b16 %v246, %v244
  %v335 = vpack.c.b16 %v249, %v247
  %v336 = vpack.c.b16 %v250, %v248
  %v337 = vpack.c.b16 %v253, %v251
  %v338 = vpack.c.b16 %v254, %v252
  %v339 = vpack.c.b16 %v257, %v255
  %v340 = vpack.c.b16 %v258, %v256
  %v341 = vpack.c.b16 %v261, %v259
  %v342 = vpack.c.b16 %v262, %v260
  %v343 = vpack.c.b16 %v265, %v263
  %v344 = vpack.c.b16 %v266, %v264
  %v345 = vpack.c.b16 %v269, %v267
  %v346 = vpack.c.b16 %v270, %v268
  %v347 = vpack.c.b16 %v273, %v271
  %v348 = vpack.c.b16 %v274, %v272
  %v349 = vpack.c.b16 %v277, %v275
  %v350 = vpack.c.b16 %v278, %v276
  %v351 = vpack.c.b16 %v281, %v279
  %v352 = vpack.c.b16 %v282, %v280
  %v353 = vpack.c.b16 %v285, %v283
  %v354 = vpack.c.b16 %v286, %v284
  %v355 = vpack.c.b16 %v289, %v287
  %v356 = vpack.c.b16 %v290, %v288
  %v357 = vpack.c.b16 %v293, %v291
  %v358 = vpack.c.b16 %v294, %v292
  %v411 = vunpack.c.l.b16 %v79
  %v412 = vunpack.c.l.b16 %v80
  %v413 = vunpack.c.l.b16 %v81
  %v414 = vunpack.c.l.b16 %v82
  %v415 = vunpack.c.l.b16 %v83
  %v416 = vunpack.c.l.b16 %v84
  %v417 = vunpack.c.l.b16 %v85
  %v418 = vunpack.c.l.b16 %v86
  %v419 = vunpack.c.l.b16 %v87
  %v420 = vunpack.c.l.b16 %v88
  %v421 = vunpack.c.l.b16 %v89
  %v422 = vunpack.c.l.b16 %v90
  %v423 = vunpack.c.l.b16 %v91
  %v424 = vunpack.c.l.b16 %v92
  %v425 = vunpack.c.l.b16 %v93
  %v426 = vunpack.c.l.b16 %v94
  %v427 = vunpack.c.l.b16 %v95
  %v428 = vunpack.c.l.b16 %v96
  %v429 = vunpack.c.l.b16 %v97
  %v430 = vunpack.c.l.b16 %v98
  %v431 = vpack.c.b16 %v412, %v411
  %v432 = vpack.c.b16 %v414, %v413
  %v433 = vpack.c.b16 %v416, %v415
  %v434 = vpack.c.b16 %v418, %v417
  %v435 = vpack.c.b16 %v420, %v419
  %v436 = vpack.c.b16 %v422, %v421
  %v437 = vpack.c.b16 %v424, %v423
  %v438 = vpack.c.b16 %v426, %v425
  %v439 = vpack.c.b16 %v428, %v427
  %v440 = vpack.c.b16 %v430, %v429
  %vm451 = vcmask 261120
  %v453 = vsel %vm451, %v296, 0
  %v456 = vsel %vm451, %v298, 0
  %v459 = vsel %vm451, %v300, 0
  %v462 = vsel %vm451, %v302, 0
  %v465 = vsel %vm451, %v304, 0
  %v468 = vsel %vm451, %v306, 0
  %v471 = vsel %vm451, %v308, 0
  %v474 = vsel %vm451, %v310, 0
  %v477 = vsel %vm451, %v312, 0
  %v480 = vsel %vm451, %v314, 0
  %v483 = vsel %vm451, %v316, 0
  %v486 = vsel %vm451, %v318, 0
  %v489 = vsel %vm451, %v320, 0
  %v492 = vsel %vm451, %v322, 0
  %v495 = vsel %vm451, %v324, 0
  %v498 = vsel %vm451, %v326, 0
  %v501 = vsel %vm451, %v328, 0
  %v504 = vsel %vm451, %v330, 0
  %v507 = vsel %vm451, %v332, 0
  %v510 = vsel %vm451, %v334, 0
  %v513 = vsel %vm451, %v336, 0
  %v516 = vsel %vm451, %v338, 0
  %v519 = vsel %vm451, %v340, 0
  %v522 = vsel %vm451, %v342, 0
  %v525 = vsel %vm451, %v344, 0
  %v528 = vsel %vm451, %v346, 0
  %v531 = vsel %vm451, %v348, 0
  %v534 = vsel %vm451, %v350, 0
  %v537 = vsel %vm451, %v352, 0
  %v540 = vsel %vm451, %v354, 0
  %v543 = vsel %vm451, %v356, 0
  %v546 = vsel %vm451, %v358, 0
  %548 = vmatpush.bf16.msra.mxu0 %v438
  %549 = vmatpush.bf16.msra.mxu0 %v437
  %550 = vmatpush.bf16.msra.mxu0 %v436
  %551 = vmatpush.bf16.msra.mxu0 %v435
  %552 = vmatpush.bf16.msra.mxu0 %v434
  %553 = vmatpush.bf16.msra.mxu0 %v433
  %554 = vmatpush.bf16.msra.mxu0 %v432
  %555 = vmatpush.bf16.msra.mxu0 %v431
  %556 = vmatmul.bf16.gmra.mxu0 %v295
  %v557 = vpop.f32.mrf.mxu0
  %v558 = vadd.f32 %v101, %v557
  %v559 = vpop.f32.mrf.mxu0
  %v560 = vadd.f32 %v101, %v559
  %561 = vmatmul.bf16.gmra.mxu0 %v297
  %v562 = vpop.f32.mrf.mxu0
  %v563 = vadd.f32 %v101, %v562
  %v564 = vpop.f32.mrf.mxu0
  %v565 = vadd.f32 %v101, %v564
  %566 = vmatmul.bf16.gmra.mxu0 %v299
  %v567 = vpop.f32.mrf.mxu0
  %v568 = vadd.f32 %v101, %v567
  %v569 = vpop.f32.mrf.mxu0
  %v570 = vadd.f32 %v101, %v569
  %571 = vmatmul.bf16.gmra.mxu0 %v301
  %v572 = vpop.f32.mrf.mxu0
  %v573 = vadd.f32 %v101, %v572
  %v574 = vpop.f32.mrf.mxu0
  %v575 = vadd.f32 %v101, %v574
  %576 = vmatmul.bf16.gmra.mxu0 %v303
  %v577 = vpop.f32.mrf.mxu0
  %v578 = vadd.f32 %v101, %v577
  %v579 = vpop.f32.mrf.mxu0
  %v580 = vadd.f32 %v101, %v579
  %581 = vmatmul.bf16.gmra.mxu0 %v305
  %v582 = vpop.f32.mrf.mxu0
  %v583 = vadd.f32 %v101, %v582
  %v584 = vpop.f32.mrf.mxu0
  %v585 = vadd.f32 %v101, %v584
  %586 = vmatmul.bf16.gmra.mxu0 %v307
  %v587 = vpop.f32.mrf.mxu0
  %v588 = vadd.f32 %v101, %v587
  %v589 = vpop.f32.mrf.mxu0
  %v590 = vadd.f32 %v101, %v589
  %591 = vmatmul.bf16.gmra.mxu0 %v309
  %v592 = vpop.f32.mrf.mxu0
  %v593 = vadd.f32 %v101, %v592
  %v594 = vpop.f32.mrf.mxu0
  %v595 = vadd.f32 %v101, %v594
  %596 = vmatmul.bf16.gmra.mxu0 %v311
  %v597 = vpop.f32.mrf.mxu0
  %v598 = vadd.f32 %v101, %v597
  %v599 = vpop.f32.mrf.mxu0
  %v600 = vadd.f32 %v101, %v599
  %601 = vmatmul.bf16.gmra.mxu0 %v313
  %v602 = vpop.f32.mrf.mxu0
  %v603 = vadd.f32 %v101, %v602
  %v604 = vpop.f32.mrf.mxu0
  %v605 = vadd.f32 %v101, %v604
  %606 = vmatmul.bf16.gmra.mxu0 %v315
  %v607 = vpop.f32.mrf.mxu0
  %v608 = vadd.f32 %v101, %v607
  %v609 = vpop.f32.mrf.mxu0
  %v610 = vadd.f32 %v101, %v609
  %611 = vmatmul.bf16.gmra.mxu0 %v317
  %v612 = vpop.f32.mrf.mxu0
  %v613 = vadd.f32 %v101, %v612
  %v614 = vpop.f32.mrf.mxu0
  %v615 = vadd.f32 %v101, %v614
  %616 = vmatmul.bf16.gmra.mxu0 %v319
  %v617 = vpop.f32.mrf.mxu0
  %v618 = vadd.f32 %v101, %v617
  %v619 = vpop.f32.mrf.mxu0
  %v620 = vadd.f32 %v101, %v619
  %621 = vmatmul.bf16.gmra.mxu0 %v321
  %v622 = vpop.f32.mrf.mxu0
  %v623 = vadd.f32 %v101, %v622
  %v624 = vpop.f32.mrf.mxu0
  %v625 = vadd.f32 %v101, %v624
  %626 = vmatmul.bf16.gmra.mxu0 %v323
  %v627 = vpop.f32.mrf.mxu0
  %v628 = vadd.f32 %v101, %v627
  %v629 = vpop.f32.mrf.mxu0
  %v630 = vadd.f32 %v101, %v629
  %631 = vmatmul.bf16.gmra.mxu0 %v325
  %v632 = vpop.f32.mrf.mxu0
  %v633 = vadd.f32 %v101, %v632
  %v634 = vpop.f32.mrf.mxu0
  %v635 = vadd.f32 %v101, %v634
  %636 = vmatmul.bf16.gmra.mxu0 %v327
  %v637 = vpop.f32.mrf.mxu0
  %v638 = vadd.f32 %v101, %v637
  %v639 = vpop.f32.mrf.mxu0
  %v640 = vadd.f32 %v101, %v639
  %641 = vmatmul.bf16.gmra.mxu0 %v329
  %v642 = vpop.f32.mrf.mxu0
  %v643 = vadd.f32 %v101, %v642
  %v644 = vpop.f32.mrf.mxu0
  %v645 = vadd.f32 %v101, %v644
  %646 = vmatmul.bf16.gmra.mxu0 %v331
  %v647 = vpop.f32.mrf.mxu0
  %v648 = vadd.f32 %v101, %v647
  %v649 = vpop.f32.mrf.mxu0
  %v650 = vadd.f32 %v101, %v649
  %651 = vmatmul.bf16.gmra.mxu0 %v333
  %v652 = vpop.f32.mrf.mxu0
  %v653 = vadd.f32 %v101, %v652
  %v654 = vpop.f32.mrf.mxu0
  %v655 = vadd.f32 %v101, %v654
  %656 = vmatmul.bf16.gmra.mxu0 %v335
  %v657 = vpop.f32.mrf.mxu0
  %v658 = vadd.f32 %v101, %v657
  %v659 = vpop.f32.mrf.mxu0
  %v660 = vadd.f32 %v101, %v659
  %661 = vmatmul.bf16.gmra.mxu0 %v337
  %v662 = vpop.f32.mrf.mxu0
  %v663 = vadd.f32 %v101, %v662
  %v664 = vpop.f32.mrf.mxu0
  %v665 = vadd.f32 %v101, %v664
  %666 = vmatmul.bf16.gmra.mxu0 %v339
  %v667 = vpop.f32.mrf.mxu0
  %v668 = vadd.f32 %v101, %v667
  %v669 = vpop.f32.mrf.mxu0
  %v670 = vadd.f32 %v101, %v669
  %671 = vmatmul.bf16.gmra.mxu0 %v341
  %v672 = vpop.f32.mrf.mxu0
  %v673 = vadd.f32 %v101, %v672
  %v674 = vpop.f32.mrf.mxu0
  %v675 = vadd.f32 %v101, %v674
  %676 = vmatmul.bf16.gmra.mxu0 %v343
  %v677 = vpop.f32.mrf.mxu0
  %v678 = vadd.f32 %v101, %v677
  %v679 = vpop.f32.mrf.mxu0
  %v680 = vadd.f32 %v101, %v679
  %681 = vmatmul.bf16.gmra.mxu0 %v345
  %v682 = vpop.f32.mrf.mxu0
  %v683 = vadd.f32 %v101, %v682
  %v684 = vpop.f32.mrf.mxu0
  %v685 = vadd.f32 %v101, %v684
  %686 = vmatmul.bf16.gmra.mxu0 %v347
  %v687 = vpop.f32.mrf.mxu0
  %v688 = vadd.f32 %v101, %v687
  %v689 = vpop.f32.mrf.mxu0
  %v690 = vadd.f32 %v101, %v689
  %691 = vmatmul.bf16.gmra.mxu0 %v349
  %v692 = vpop.f32.mrf.mxu0
  %v693 = vadd.f32 %v101, %v692
  %v694 = vpop.f32.mrf.mxu0
  %v695 = vadd.f32 %v101, %v694
  %696 = vmatmul.bf16.gmra.mxu0 %v351
  %v697 = vpop.f32.mrf.mxu0
  %v698 = vadd.f32 %v101, %v697
  %v699 = vpop.f32.mrf.mxu0
  %v700 = vadd.f32 %v101, %v699
  %701 = vmatmul.bf16.gmra.mxu0 %v353
  %v702 = vpop.f32.mrf.mxu0
  %v703 = vadd.f32 %v101, %v702
  %v704 = vpop.f32.mrf.mxu0
  %v705 = vadd.f32 %v101, %v704
  %706 = vmatmul.bf16.gmra.mxu0 %v355
  %v707 = vpop.f32.mrf.mxu0
  %v708 = vadd.f32 %v101, %v707
  %v709 = vpop.f32.mrf.mxu0
  %v710 = vadd.f32 %v101, %v709
  %711 = vmatmul.bf16.gmra.mxu0 %v357
  %v712 = vpop.f32.mrf.mxu0
  %v713 = vadd.f32 %v101, %v712
  %v714 = vpop.f32.mrf.mxu0
  %v715 = vadd.f32 %v101, %v714
  %716 = vdwg.mxu0
  %717 = vmatpush.bf16.msra.mxu0 0
  %718 = vmatpush.bf16.msra.mxu0 0
  %719 = vmatpush.bf16.msra.mxu0 0
  %720 = vmatpush.bf16.msra.mxu0 0
  %721 = vmatpush.bf16.msra.mxu0 0
  %722 = vmatpush.bf16.msra.mxu0 0
  %723 = vmatpush.bf16.msra.mxu0 %v440
  %724 = vmatpush.bf16.msra.mxu0 %v439
  %725 = vmatmul.bf16.gmra.mxu0 %v453
  %v726 = vpop.f32.mrf.mxu0
  %v727 = vadd.f32 %v558, %v726
  %v728 = vpop.f32.mrf.mxu0
  %v729 = vadd.f32 %v560, %v728
  %730 = vmatmul.bf16.gmra.mxu0 %v456
  %v731 = vpop.f32.mrf.mxu0
  %v732 = vadd.f32 %v563, %v731
  %v733 = vpop.f32.mrf.mxu0
  %v734 = vadd.f32 %v565, %v733
  %735 = vmatmul.bf16.gmra.mxu0 %v459
  %v736 = vpop.f32.mrf.mxu0
  %v737 = vadd.f32 %v568, %v736
  %v738 = vpop.f32.mrf.mxu0
  %v739 = vadd.f32 %v570, %v738
  %740 = vmatmul.bf16.gmra.mxu0 %v462
  %v741 = vpop.f32.mrf.mxu0
  %v742 = vadd.f32 %v573, %v741
  %v743 = vpop.f32.mrf.mxu0
  %v744 = vadd.f32 %v575, %v743
  %745 = vmatmul.bf16.gmra.mxu0 %v465
  %v746 = vpop.f32.mrf.mxu0
  %v747 = vadd.f32 %v578, %v746
  %v748 = vpop.f32.mrf.mxu0
  %v749 = vadd.f32 %v580, %v748
  %750 = vmatmul.bf16.gmra.mxu0 %v468
  %v751 = vpop.f32.mrf.mxu0
  %v752 = vadd.f32 %v583, %v751
  %v753 = vpop.f32.mrf.mxu0
  %v754 = vadd.f32 %v585, %v753
  %755 = vmatmul.bf16.gmra.mxu0 %v471
  %v756 = vpop.f32.mrf.mxu0
  %v757 = vadd.f32 %v588, %v756
  %v758 = vpop.f32.mrf.mxu0
  %v759 = vadd.f32 %v590, %v758
  %760 = vmatmul.bf16.gmra.mxu0 %v474
  %v761 = vpop.f32.mrf.mxu0
  %v762 = vadd.f32 %v593, %v761
  %v763 = vpop.f32.mrf.mxu0
  %v764 = vadd.f32 %v595, %v763
  %765 = vmatmul.bf16.gmra.mxu0 %v477
  %v766 = vpop.f32.mrf.mxu0
  %v767 = vadd.f32 %v598, %v766
  %v768 = vpop.f32.mrf.mxu0
  %v769 = vadd.f32 %v600, %v768
  %770 = vmatmul.bf16.gmra.mxu0 %v480
  %v771 = vpop.f32.mrf.mxu0
  %v772 = vadd.f32 %v603, %v771
  %v773 = vpop.f32.mrf.mxu0
  %v774 = vadd.f32 %v605, %v773
  %775 = vmatmul.bf16.gmra.mxu0 %v483
  %v776 = vpop.f32.mrf.mxu0
  %v777 = vadd.f32 %v608, %v776
  %v778 = vpop.f32.mrf.mxu0
  %v779 = vadd.f32 %v610, %v778
  %780 = vmatmul.bf16.gmra.mxu0 %v486
  %v781 = vpop.f32.mrf.mxu0
  %v782 = vadd.f32 %v613, %v781
  %v783 = vpop.f32.mrf.mxu0
  %v784 = vadd.f32 %v615, %v783
  %785 = vmatmul.bf16.gmra.mxu0 %v489
  %v786 = vpop.f32.mrf.mxu0
  %v787 = vadd.f32 %v618, %v786
  %v788 = vpop.f32.mrf.mxu0
  %v789 = vadd.f32 %v620, %v788
  %790 = vmatmul.bf16.gmra.mxu0 %v492
  %v791 = vpop.f32.mrf.mxu0
  %v792 = vadd.f32 %v623, %v791
  %v793 = vpop.f32.mrf.mxu0
  %v794 = vadd.f32 %v625, %v793
  %795 = vmatmul.bf16.gmra.mxu0 %v495
  %v796 = vpop.f32.mrf.mxu0
  %v797 = vadd.f32 %v628, %v796
  %v798 = vpop.f32.mrf.mxu0
  %v799 = vadd.f32 %v630, %v798
  %800 = vmatmul.bf16.gmra.mxu0 %v498
  %v801 = vpop.f32.mrf.mxu0
  %v802 = vadd.f32 %v633, %v801
  %v803 = vpop.f32.mrf.mxu0
  %v804 = vadd.f32 %v635, %v803
  %805 = vmatmul.bf16.gmra.mxu0 %v501
  %v806 = vpop.f32.mrf.mxu0
  %v807 = vadd.f32 %v638, %v806
  %v808 = vpop.f32.mrf.mxu0
  %v809 = vadd.f32 %v640, %v808
  %810 = vmatmul.bf16.gmra.mxu0 %v504
  %v811 = vpop.f32.mrf.mxu0
  %v812 = vadd.f32 %v643, %v811
  %v813 = vpop.f32.mrf.mxu0
  %v814 = vadd.f32 %v645, %v813
  %815 = vmatmul.bf16.gmra.mxu0 %v507
  %v816 = vpop.f32.mrf.mxu0
  %v817 = vadd.f32 %v648, %v816
  %v818 = vpop.f32.mrf.mxu0
  %v819 = vadd.f32 %v650, %v818
  %820 = vmatmul.bf16.gmra.mxu0 %v510
  %v821 = vpop.f32.mrf.mxu0
  %v822 = vadd.f32 %v653, %v821
  %v823 = vpop.f32.mrf.mxu0
  %v824 = vadd.f32 %v655, %v823
  %825 = vmatmul.bf16.gmra.mxu0 %v513
  %v826 = vpop.f32.mrf.mxu0
  %v827 = vadd.f32 %v658, %v826
  %v828 = vpop.f32.mrf.mxu0
  %v829 = vadd.f32 %v660, %v828
  %830 = vmatmul.bf16.gmra.mxu0 %v516
  %v831 = vpop.f32.mrf.mxu0
  %v832 = vadd.f32 %v663, %v831
  %v833 = vpop.f32.mrf.mxu0
  %v834 = vadd.f32 %v665, %v833
  %835 = vmatmul.bf16.gmra.mxu0 %v519
  %v836 = vpop.f32.mrf.mxu0
  %v837 = vadd.f32 %v668, %v836
  %v838 = vpop.f32.mrf.mxu0
  %v839 = vadd.f32 %v670, %v838
  %840 = vmatmul.bf16.gmra.mxu0 %v522
  %v841 = vpop.f32.mrf.mxu0
  %v842 = vadd.f32 %v673, %v841
  %v843 = vpop.f32.mrf.mxu0
  %v844 = vadd.f32 %v675, %v843
  %845 = vmatmul.bf16.gmra.mxu0 %v525
  %v846 = vpop.f32.mrf.mxu0
  %v847 = vadd.f32 %v678, %v846
  %v848 = vpop.f32.mrf.mxu0
  %v849 = vadd.f32 %v680, %v848
  %850 = vmatmul.bf16.gmra.mxu0 %v528
  %v851 = vpop.f32.mrf.mxu0
  %v852 = vadd.f32 %v683, %v851
  %v853 = vpop.f32.mrf.mxu0
  %v854 = vadd.f32 %v685, %v853
  %855 = vmatmul.bf16.gmra.mxu0 %v531
  %v856 = vpop.f32.mrf.mxu0
  %v857 = vadd.f32 %v688, %v856
  %v858 = vpop.f32.mrf.mxu0
  %v859 = vadd.f32 %v690, %v858
  %860 = vmatmul.bf16.gmra.mxu0 %v534
  %v861 = vpop.f32.mrf.mxu0
  %v862 = vadd.f32 %v693, %v861
  %v863 = vpop.f32.mrf.mxu0
  %v864 = vadd.f32 %v695, %v863
  %865 = vmatmul.bf16.gmra.mxu0 %v537
  %v866 = vpop.f32.mrf.mxu0
  %v867 = vadd.f32 %v698, %v866
  %v868 = vpop.f32.mrf.mxu0
  %v869 = vadd.f32 %v700, %v868
  %870 = vmatmul.bf16.gmra.mxu0 %v540
  %v871 = vpop.f32.mrf.mxu0
  %v872 = vadd.f32 %v703, %v871
  %v873 = vpop.f32.mrf.mxu0
  %v874 = vadd.f32 %v705, %v873
  %875 = vmatmul.bf16.gmra.mxu0 %v543
  %v876 = vpop.f32.mrf.mxu0
  %v877 = vadd.f32 %v708, %v876
  %v878 = vpop.f32.mrf.mxu0
  %v879 = vadd.f32 %v710, %v878
  %880 = vmatmul.bf16.gmra.mxu0 %v546
  %v881 = vpop.f32.mrf.mxu0
  %v882 = vadd.f32 %v713, %v881
  %v883 = vpop.f32.mrf.mxu0
  %v884 = vadd.f32 %v715, %v883
  %885 = vdwg.mxu0
  %v886 = vmax.f32 %v727, 0.0
  %v887 = vmax.f32 %v729, 0.0
  %v888 = vmax.f32 %v732, 0.0
  %v889 = vmax.f32 %v734, 0.0
  %v890 = vmax.f32 %v737, 0.0
  %v891 = vmax.f32 %v739, 0.0
  %v892 = vmax.f32 %v742, 0.0
  %v893 = vmax.f32 %v744, 0.0
  %v894 = vmax.f32 %v747, 0.0
  %v895 = vmax.f32 %v749, 0.0
  %v896 = vmax.f32 %v752, 0.0
  %v897 = vmax.f32 %v754, 0.0
  %v898 = vmax.f32 %v757, 0.0
  %v899 = vmax.f32 %v759, 0.0
  %v900 = vmax.f32 %v762, 0.0
  %v901 = vmax.f32 %v764, 0.0
  %v902 = vmax.f32 %v767, 0.0
  %v903 = vmax.f32 %v769, 0.0
  %v904 = vmax.f32 %v772, 0.0
  %v905 = vmax.f32 %v774, 0.0
  %v906 = vmax.f32 %v777, 0.0
  %v907 = vmax.f32 %v779, 0.0
  %v908 = vmax.f32 %v782, 0.0
  %v909 = vmax.f32 %v784, 0.0
  %v910 = vmax.f32 %v787, 0.0
  %v911 = vmax.f32 %v789, 0.0
  %v912 = vmax.f32 %v792, 0.0
  %v913 = vmax.f32 %v794, 0.0
  %v914 = vmax.f32 %v797, 0.0
  %v915 = vmax.f32 %v799, 0.0
  %v916 = vmax.f32 %v802, 0.0
  %v917 = vmax.f32 %v804, 0.0
  %v918 = vmax.f32 %v807, 0.0
  %v919 = vmax.f32 %v809, 0.0
  %v920 = vmax.f32 %v812, 0.0
  %v921 = vmax.f32 %v814, 0.0
  %v922 = vmax.f32 %v817, 0.0
  %v923 = vmax.f32 %v819, 0.0
  %v924 = vmax.f32 %v822, 0.0
  %v925 = vmax.f32 %v824, 0.0
  %v926 = vmax.f32 %v827, 0.0
  %v927 = vmax.f32 %v829, 0.0
  %v928 = vmax.f32 %v832, 0.0
  %v929 = vmax.f32 %v834, 0.0
  %v930 = vmax.f32 %v837, 0.0
  %v931 = vmax.f32 %v839, 0.0
  %v932 = vmax.f32 %v842, 0.0
  %v933 = vmax.f32 %v844, 0.0
  %v934 = vmax.f32 %v847, 0.0
  %v935 = vmax.f32 %v849, 0.0
  %v936 = vmax.f32 %v852, 0.0
  %v937 = vmax.f32 %v854, 0.0
  %v938 = vmax.f32 %v857, 0.0
  %v939 = vmax.f32 %v859, 0.0
  %v940 = vmax.f32 %v862, 0.0
  %v941 = vmax.f32 %v864, 0.0
  %v942 = vmax.f32 %v867, 0.0
  %v943 = vmax.f32 %v869, 0.0
  %v944 = vmax.f32 %v872, 0.0
  %v945 = vmax.f32 %v874, 0.0
  %v946 = vmax.f32 %v877, 0.0
  %v947 = vmax.f32 %v879, 0.0
  %v948 = vmax.f32 %v882, 0.0
  %v949 = vmax.f32 %v884, 0.0
  %v950 = vpack.c.bf16 %v886, %v886
  %v951 = vpack.c.bf16 %v887, %v887
  %v952 = vpack.c.bf16 %v888, %v888
  %v953 = vpack.c.bf16 %v889, %v889
  %v954 = vpack.c.bf16 %v890, %v890
  %v955 = vpack.c.bf16 %v891, %v891
  %v956 = vpack.c.bf16 %v892, %v892
  %v957 = vpack.c.bf16 %v893, %v893
  %v958 = vpack.c.bf16 %v894, %v894
  %v959 = vpack.c.bf16 %v895, %v895
  %v960 = vpack.c.bf16 %v896, %v896
  %v961 = vpack.c.bf16 %v897, %v897
  %v962 = vpack.c.bf16 %v898, %v898
  %v963 = vpack.c.bf16 %v899, %v899
  %v964 = vpack.c.bf16 %v900, %v900
  %v965 = vpack.c.bf16 %v901, %v901
  %v966 = vpack.c.bf16 %v902, %v902
  %v967 = vpack.c.bf16 %v903, %v903
  %v968 = vpack.c.bf16 %v904, %v904
  %v969 = vpack.c.bf16 %v905, %v905
  %v970 = vpack.c.bf16 %v906, %v906
  %v971 = vpack.c.bf16 %v907, %v907
  %v972 = vpack.c.bf16 %v908, %v908
  %v973 = vpack.c.bf16 %v909, %v909
  %v974 = vpack.c.bf16 %v910, %v910
  %v975 = vpack.c.bf16 %v911, %v911
  %v976 = vpack.c.bf16 %v912, %v912
  %v977 = vpack.c.bf16 %v913, %v913
  %v978 = vpack.c.bf16 %v914, %v914
  %v979 = vpack.c.bf16 %v915, %v915
  %v980 = vpack.c.bf16 %v916, %v916
  %v981 = vpack.c.bf16 %v917, %v917
  %v982 = vpack.c.bf16 %v918, %v918
  %v983 = vpack.c.bf16 %v919, %v919
  %v984 = vpack.c.bf16 %v920, %v920
  %v985 = vpack.c.bf16 %v921, %v921
  %v986 = vpack.c.bf16 %v922, %v922
  %v987 = vpack.c.bf16 %v923, %v923
  %v988 = vpack.c.bf16 %v924, %v924
  %v989 = vpack.c.bf16 %v925, %v925
  %v990 = vpack.c.bf16 %v926, %v926
  %v991 = vpack.c.bf16 %v927, %v927
  %v992 = vpack.c.bf16 %v928, %v928
  %v993 = vpack.c.bf16 %v929, %v929
  %v994 = vpack.c.bf16 %v930, %v930
  %v995 = vpack.c.bf16 %v931, %v931
  %v996 = vpack.c.bf16 %v932, %v932
  %v997 = vpack.c.bf16 %v933, %v933
  %v998 = vpack.c.bf16 %v934, %v934
  %v999 = vpack.c.bf16 %v935, %v935
  %v1000 = vpack.c.bf16 %v936, %v936
  %v1001 = vpack.c.bf16 %v937, %v937
  %v1002 = vpack.c.bf16 %v938, %v938
  %v1003 = vpack.c.bf16 %v939, %v939
  %v1004 = vpack.c.bf16 %v940, %v940
  %v1005 = vpack.c.bf16 %v941, %v941
  %v1006 = vpack.c.bf16 %v942, %v942
  %v1007 = vpack.c.bf16 %v943, %v943
  %v1008 = vpack.c.bf16 %v944, %v944
  %v1009 = vpack.c.bf16 %v945, %v945
  %v1010 = vpack.c.bf16 %v946, %v946
  %v1011 = vpack.c.bf16 %v947, %v947
  %v1012 = vpack.c.bf16 %v948, %v948
  %v1013 = vpack.c.bf16 %v949, %v949
  %1014 = vst [vmem:[%s3] sm:$0xf] %v950
  %1015 = vst [vmem:[%s3 + $0x4] sm:$0xf] %v951
  %1016 = vst [vmem:[%s3 + $0x8] sm:$0xf] %v952
  %1017 = vst [vmem:[%s3 + $0xc] sm:$0xf] %v953
  %1018 = vst [vmem:[%s3 + $0x10] sm:$0xf] %v954
  %1019 = vst [vmem:[%s3 + $0x14] sm:$0xf] %v955
  %1020 = vst [vmem:[%s3 + $0x18] sm:$0xf] %v956
  %1021 = vst [vmem:[%s3 + $0x1c] sm:$0xf] %v957
  %1022 = vst [vmem:[%s3 + $0x20] sm:$0xf] %v958
  %1023 = vst [vmem:[%s3 + $0x24] sm:$0xf] %v959
  %1024 = vst [vmem:[%s3 + $0x28] sm:$0xf] %v960
  %1025 = vst [vmem:[%s3 + $0x2c] sm:$0xf] %v961
  %1026 = vst [vmem:[%s3 + $0x30] sm:$0xf] %v962
  %1027 = vst [vmem:[%s3 + $0x34] sm:$0xf] %v963
  %1028 = vst [vmem:[%s3 + $0x38] sm:$0xf] %v964
  %1029 = vst [vmem:[%s3 + $0x3c] sm:$0xf] %v965
  %1030 = vst [vmem:[%s3 + $0x40] sm:$0xf] %v966
  %1031 = vst [vmem:[%s3 + $0x44] sm:$0xf] %v967
  %1032 = vst [vmem:[%s3 + $0x48] sm:$0xf] %v968
  %1033 = vst [vmem:[%s3 + $0x4c] sm:$0xf] %v969
  %1034 = vst [vmem:[%s3 + $0x50] sm:$0xf] %v970
  %1035 = vst [vmem:[%s3 + $0x54] sm:$0xf] %v971
  %1036 = vst [vmem:[%s3 + $0x58] sm:$0xf] %v972
  %1037 = vst [vmem:[%s3 + $0x5c] sm:$0xf] %v973
  %1038 = vst [vmem:[%s3 + $0x60] sm:$0xf] %v974
  %1039 = vst [vmem:[%s3 + $0x64] sm:$0xf] %v975
  %1040 = vst [vmem:[%s3 + $0x68] sm:$0xf] %v976
  %1041 = vst [vmem:[%s3 + $0x6c] sm:$0xf] %v977
  %1042 = vst [vmem:[%s3 + $0x70] sm:$0xf] %v978
  %1043 = vst [vmem:[%s3 + $0x74] sm:$0xf] %v979
  %1044 = vst [vmem:[%s3 + $0x78] sm:$0xf] %v980
  %1045 = vst [vmem:[%s3 + $0x7c] sm:$0xf] %v981
  %1046 = vst [vmem:[%s3 + $0x80] sm:$0xf] %v982
  %1047 = vst [vmem:[%s3 + $0x84] sm:$0xf] %v983
  %1048 = vst [vmem:[%s3 + $0x88] sm:$0xf] %v984
  %1049 = vst [vmem:[%s3 + $0x8c] sm:$0xf] %v985
  %1050 = vst [vmem:[%s3 + $0x90] sm:$0xf] %v986
  %1051 = vst [vmem:[%s3 + $0x94] sm:$0xf] %v987
  %1052 = vst [vmem:[%s3 + $0x98] sm:$0xf] %v988
  %1053 = vst [vmem:[%s3 + $0x9c] sm:$0xf] %v989
  %1054 = vst [vmem:[%s3 + $0xa0] sm:$0xf] %v990
  %1055 = vst [vmem:[%s3 + $0xa4] sm:$0xf] %v991
  %1056 = vst [vmem:[%s3 + $0xa8] sm:$0xf] %v992
  %1057 = vst [vmem:[%s3 + $0xac] sm:$0xf] %v993
  %1058 = vst [vmem:[%s3 + $0xb0] sm:$0xf] %v994
  %1059 = vst [vmem:[%s3 + $0xb4] sm:$0xf] %v995
  %1060 = vst [vmem:[%s3 + $0xb8] sm:$0xf] %v996
  %1061 = vst [vmem:[%s3 + $0xbc] sm:$0xf] %v997
  %1062 = vst [vmem:[%s3 + $0xc0] sm:$0xf] %v998
  %1063 = vst [vmem:[%s3 + $0xc4] sm:$0xf] %v999
  %1064 = vst [vmem:[%s3 + $0xc8] sm:$0xf] %v1000
  %1065 = vst [vmem:[%s3 + $0xcc] sm:$0xf] %v1001
  %1066 = vst [vmem:[%s3 + $0xd0] sm:$0xf] %v1002
  %1067 = vst [vmem:[%s3 + $0xd4] sm:$0xf] %v1003
  %1068 = vst [vmem:[%s3 + $0xd8] sm:$0xf] %v1004
  %1069 = vst [vmem:[%s3 + $0xdc] sm:$0xf] %v1005
  %1070 = vst [vmem:[%s3 + $0xe0] sm:$0xf] %v1006
  %1071 = vst [vmem:[%s3 + $0xe4] sm:$0xf] %v1007
  %1072 = vst [vmem:[%s3 + $0xe8] sm:$0xf] %v1008
  %1073 = vst [vmem:[%s3 + $0xec] sm:$0xf] %v1009
  %1074 = vst [vmem:[%s3 + $0xf0] sm:$0xf] %v1010
  %1075 = vst [vmem:[%s3 + $0xf4] sm:$0xf] %v1011
  %1076 = vst [vmem:[%s3 + $0xf8] sm:$0xf] %v1012
  %1077 = vst [vmem:[%s3 + $0xfc] sm:$0xf] %v1013
  // Predicated region
  $region14: #{_lambda_.4} parent=0 // pred_check
    _
  $region15: #{_lambda_.4} parent=0 // pred_check_branch
    %1079 = sbr.rel (0) target = $region17
  $region16: #{_lambda_.4} parent=0 // pred_region
    _
  $region17: #{_lambda_.4} parent=0 // pred_fallthru
    _
  // Predicated region
  $region18: #{_lambda_.4} parent=0 // pred_check
    _
  $region19: #{_lambda_.4} parent=0 // pred_check_branch
    %1081 = sbr.rel (0) target = $region21
  $region20: #{_lambda_.4} parent=0 // pred_region
    _
  $region21: #{_lambda_.4} parent=0 // pred_fallthru
    _

// kernel: _lambda_.7
$region0: #{_lambda_.7}
  #allocation0 [shape = 'u32[]', space=smem, size = 0x4, offset = 0x4, fixed_abs, tag = 'smem constant byte address 0x4 - core index']
  #allocation1 [shape = 'u32[72,128]{1,0:T(1,128)}', space=vmem, size = 0x9000, scoped, tag = 'internal scratch']
  %s0 = inlined_call_operand.vmem [shape: bf16[8,128], index: 0, kind: input, shape index: {}]
  %s1 = inlined_call_operand.vmem [shape: bf16[2,128,128], index: 1, kind: input, shape index: {}]
  %s2 = inlined_call_operand.vmem [shape: f32[2,1,128], index: 2, kind: input, shape index: {}]
  %s3 = inlined_call_operand.vmem [shape: bf16[8,128], index: 3, kind: output, shape index: {}]
  %s4 = sld [smem:[#allocation0]]
  $region49: #{_lambda_.7} parent=0
    _
  %s6 = ssub.s32 1, %s4
  %s7 = scalar_select 0, %s6, %s4
  loop: start=0, step=1, limit=4
  $region2: #{_lambda_.7} parent=0 // loop_pre_header
    _
  $region3: #{_lambda_.7} parent=0 // loop_header
    %s9 = sphi 0, %s13
    %p10 = scmp.ge.s32.totalorder %s9, 4
    %s16 = sphi 0, %s28
    %s17 = sphi 0, %s24
    %s18 = sphi 0, %s16
    %s19 = sphi 0, %s17
    %s20 = sphi 0, %s18
    %s21 = sphi 0, %s19
    %s31 = sphi 0, %s33
    %s34 = sphi 0, %s31
    %s35 = sphi 0, %s34
    %s51 = sphi 0, %s35
    %s57 = sphi 0, %s59
    %s60 = sphi 0, %s57
    %s61 = sphi 0, %s60
    %s77 = sphi 0, %s61
    %s83 = sphi 0, %s85
    %s86 = sphi 0, %s83
    %s87 = sphi 0, %s86
    %s103 = sphi 0, %s87
    %s109 = sphi 0, %s111
    %s112 = sphi 0, %s109
    %s113 = sphi 0, %s112
    %s129 = sphi 0, %s113
  $region4: #{_lambda_.7} parent=0 // loop_header_branch
    %12 = sbr.rel (%p10) target = $region8
  $region5: #{_lambda_.7} parent=0 // loop_body
    %s14 = ssub.s32 %s9, 1
    %s15 = ssub.s32 %s9, 2
    %s22 = sadd.s32 1, %s17
    %p23 = scmp.ge.s32.totalorder %s22, 2
    %s24 = scalar_select %p23, 0, %s22
    %s25 = sadd.s32 1, %s16
    %s26 = scalar_select %p23, %s25, %s16
    %p27 = scmp.ge.s32.totalorder %s26, 1
    %s28 = scalar_select %p27, 0, %s26
    %s29 = ssub.s32 %s16, %s28
    %p30 = scmp.eq.s32.totalorder %s29, 0
    %s32 = sadd.s32 %s31, 1
    %s33 = scalar_select %p30, %s31, %s32
    %p36 = pneg %p30
    %p37 = scmp.eq.s32.totalorder %s9, 1
    %p38 = por %p36, %p37
    %p39 = scmp.ne.s32.totalorder %s31, %s34
    %p40 = scmp.eq.s32.totalorder %s9, 0
    %p41 = por %p39, %p40
    %p42 = scmp.ne.s32.totalorder %s31, %s34
    %p43 = scmp.eq.s32.totalorder %s14, 1
    %p44 = por %p42, %p43
    %p45 = scmp.ne.s32.totalorder %s34, %s35
    %p46 = scmp.eq.s32.totalorder %s14, 0
    %p47 = por %p45, %p46
    %p48 = scmp.ne.s32.totalorder %s34, %s35
    %p49 = scmp.eq.s32.totalorder %s15, 1
    %p50 = por %p48, %p49
    %p52 = scmp.ne.s32.totalorder %s35, %s51
    %p53 = scmp.eq.s32.totalorder %s15, 0
    %p54 = por %p52, %p53
    %s55 = ssub.s32 %s17, %s24
    %p56 = scmp.eq.s32.totalorder %s55, 0
    %s58 = sadd.s32 %s57, 1
    %s59 = scalar_select %p56, %s57, %s58
    %p62 = pneg %p56
    %p63 = scmp.eq.s32.totalorder %s9, 1
    %p64 = por %p62, %p63
    %p65 = scmp.ne.s32.totalorder %s57, %s60
    %p66 = scmp.eq.s32.totalorder %s9, 0
    %p67 = por %p65, %p66
    %p68 = scmp.ne.s32.totalorder %s57, %s60
    %p69 = scmp.eq.s32.totalorder %s14, 1
    %p70 = por %p68, %p69
    %p71 = scmp.ne.s32.totalorder %s60, %s61
    %p72 = scmp.eq.s32.totalorder %s14, 0
    %p73 = por %p71, %p72
    %p74 = scmp.ne.s32.totalorder %s60, %s61
    %p75 = scmp.eq.s32.totalorder %s15, 1
    %p76 = por %p74, %p75
    %p78 = scmp.ne.s32.totalorder %s61, %s77
    %p79 = scmp.eq.s32.totalorder %s15, 0
    %p80 = por %p78, %p79
    %s81 = ssub.s32 %s17, %s24
    %p82 = scmp.eq.s32.totalorder %s81, 0
    %s84 = sadd.s32 %s83, 1
    %s85 = scalar_select %p82, %s83, %s84
    %p88 = pneg %p82
    %p89 = scmp.eq.s32.totalorder %s9, 1
    %p90 = por %p88, %p89
    %p91 = scmp.ne.s32.totalorder %s83, %s86
    %p92 = scmp.eq.s32.totalorder %s9, 0
    %p93 = por %p91, %p92
    %p94 = scmp.ne.s32.totalorder %s83, %s86
    %p95 = scmp.eq.s32.totalorder %s14, 1
    %p96 = por %p94, %p95
    %p97 = scmp.ne.s32.totalorder %s86, %s87
    %p98 = scmp.eq.s32.totalorder %s14, 0
    %p99 = por %p97, %p98
    %p100 = scmp.ne.s32.totalorder %s86, %s87
    %p101 = scmp.eq.s32.totalorder %s15, 1
    %p102 = por %p100, %p101
    %p104 = scmp.ne.s32.totalorder %s87, %s103
    %p105 = scmp.eq.s32.totalorder %s15, 0
    %p106 = por %p104, %p105
    %s107 = ssub.s32 %s16, %s28
    %p108 = scmp.eq.s32.totalorder %s107, 0
    %s110 = sadd.s32 %s109, 1
    %s111 = scalar_select %p108, %s109, %s110
    %p114 = pneg %p108
    %p115 = scmp.eq.s32.totalorder %s9, 1
    %p116 = por %p114, %p115
    %p117 = scmp.ne.s32.totalorder %s109, %s112
    %p118 = scmp.eq.s32.totalorder %s9, 0
    %p119 = por %p117, %p118
    %p120 = scmp.ne.s32.totalorder %s109, %s112
    %p121 = scmp.eq.s32.totalorder %s14, 1
    %p122 = por %p120, %p121
    %p123 = scmp.ne.s32.totalorder %s112, %s113
    %p124 = scmp.eq.s32.totalorder %s14, 0
    %p125 = por %p123, %p124
    %p126 = scmp.ne.s32.totalorder %s112, %s113
    %p127 = scmp.eq.s32.totalorder %s15, 1
    %p128 = por %p126, %p127
    %p130 = scmp.ne.s32.totalorder %s113, %s129
    %p131 = scmp.eq.s32.totalorder %s15, 0
    %p132 = por %p130, %p131
    %p133 = scmp.le.s32.totalorder 1, %s9
    %p134 = scmp.lt.s32.totalorder %s9, 3
    %p135 = pnand %p133, %p134
    %p136 = pneg %p135
    // Predicated region
    $region9: #{_lambda_.7} parent=5 // pred_check
      _
    $region10: #{_lambda_.7} parent=5 // pred_check_branch
      %138 = sbr.rel (%p135) target = $region12
    $region11: #{_lambda_.7} parent=5 // pred_region
      %s139 = ssub.s32 %s9, 1
      // Predicated region
      $region13: #{_lambda_.7} parent=11 // pred_check
        %p140 = pneg %p47
      $region14: #{_lambda_.7} parent=11 // pred_check_branch
        %142 = sbr.rel (%p140) target = $region16
      $region15: #{_lambda_.7} parent=11 // pred_region
        %p143 = scmp.lt.s32.totalorder %s18, 0
        %s144 = scalar_select %p143, %s18, 0
        %s145 = smul.addr %s144, 4
        %s146 = scalar_lea.vmem %s0, %s145
      $region16: #{_lambda_.7} parent=11 // pred_fallthru
        _
    $region12: #{_lambda_.7} parent=5 // pred_fallthru
      _
    %p147 = scmp.lt.s32.totalorder %s9, 2
    // Predicated region
    $region17: #{_lambda_.7} parent=5 // pred_check
      %p148 = pneg %p147
    $region18: #{_lambda_.7} parent=5 // pred_check_branch
      %150 = sbr.rel (%p148) target = $region20
    $region19: #{_lambda_.7} parent=5 // pred_region
      // Predicated region
      $region21: #{_lambda_.7} parent=19 // pred_check
        %p151 = pneg %p67
      $region22: #{_lambda_.7} parent=19 // pred_check_branch
        %153 = sbr.rel (%p151) target = $region24
      $region23: #{_lambda_.7} parent=19 // pred_region
        %p154 = scmp.lt.s32.totalorder %s17, 1
        %s155 = scalar_select %p154, %s17, 1
        %s156 = smul.addr %s155, 16
        %s157 = smul.addr %s156, 4
        %s158 = scalar_lea.vmem %s1, %s157
      $region24: #{_lambda_.7} parent=19 // pred_fallthru
        _
      // Predicated region
      $region25: #{_lambda_.7} parent=19 // pred_check
        %p159 = pneg %p93
      $region26: #{_lambda_.7} parent=19 // pred_check_branch
        %161 = sbr.rel (%p159) target = $region28
      $region27: #{_lambda_.7} parent=19 // pred_region
        %p162 = scmp.lt.s32.totalorder %s17, 1
        %s163 = scalar_select %p162, %s17, 1
        %s164 = scalar_lea.vmem %s2, %s163
      $region28: #{_lambda_.7} parent=19 // pred_fallthru
        _
    $region20: #{_lambda_.7} parent=5 // pred_fallthru
      _
    %p165 = scmp.le.s32.totalorder 1, %s9
    %p166 = scmp.lt.s32.totalorder %s9, 3
    %p167 = pnand %p165, %p166
    %p168 = pneg %p167
    // Predicated region
    $region29: #{_lambda_.7} parent=5 // pred_check
      _
    $region30: #{_lambda_.7} parent=5 // pred_check_branch
      %170 = sbr.rel (%p167) target = $region32
    $region31: #{_lambda_.7} parent=5 // pred_region
      %s171 = ssub.s32 %s9, 1
      %p172 = scmp.lt.s32.totalorder %s18, 0
      %s173 = scalar_select %p172, %s18, 0
      %s174 = smul.addr %s173, 4
      %s175 = scalar_lea.vmem %s0, %s174
      %p176 = pneg %p47
      %p177 = pneg %p44
      %p178 = scmp.lt.s32.totalorder %s19, 1
      %s179 = scalar_select %p178, %s19, 1
      %s180 = smul.addr %s179, 16
      %s181 = smul.addr %s180, 4
      %s182 = scalar_lea.vmem %s1, %s181
      %p183 = pneg %p73
      %p184 = pneg %p70
      %p185 = scmp.lt.s32.totalorder %s19, 1
      %s186 = scalar_select %p185, %s19, 1
      %s187 = scalar_lea.vmem %s2, %s186
      %p188 = pneg %p99
      %p189 = pneg %p96
      %p190 = pneg %p125
      %p191 = pneg %p122
      %p192 = scmp.lt.s32.totalorder %s18, 0
      %s193 = scalar_select %p192, %s18, 0
      %s194 = smul.addr %s193, 4
      %s195 = scalar_lea.vmem %s3, %s194
      %p196 = scmp.lt.s32.totalorder %s18, 0
      %s197 = scalar_select %p196, %s18, 0
      %s198 = smul.addr %s197, 4
      %s199 = scalar_lea.vmem %s0, %s198
      %p200 = scmp.lt.s32.totalorder %s19, 1
      %s201 = scalar_select %p200, %s19, 1
      %s202 = smul.addr %s201, 16
      %s203 = smul.addr %s202, 4
      %s204 = scalar_lea.vmem %s1, %s203
      %p205 = scmp.lt.s32.totalorder %s19, 1
      %s206 = scalar_select %p205, %s19, 1
      %s207 = scalar_lea.vmem %s2, %s206
      %p208 = scmp.lt.s32.totalorder %s18, 0
      %s209 = scalar_select %p208, %s18, 0
      %s210 = smul.addr %s209, 4
      %s211 = scalar_lea.vmem %s3, %s210
      %p212 = scmp.eq.s32.totalorder %s19, 0
      // Predicated region
      $region33: #{_lambda_.7} parent=31 // pred_check
        %p213 = pneg %p212
      $region34: #{_lambda_.7} parent=31 // pred_check_branch
        %215 = sbr.rel (%p213) target = $region36
      $region35: #{_lambda_.7} parent=31 // pred_region
        %v216 = vld [vmem:[%s199] sm:$0xf]
        %217 = vst [vmem:[%s211] sm:$0xf] %v216
      $region36: #{_lambda_.7} parent=31 // pred_fallthru
        _
      %v218 = vld [vmem:[%s211] sm:$0xf]
      %v219 = vld [vmem:[%s204] sm:$0xf]
      %v220 = vld [vmem:[%s204 + $0x4] sm:$0xf]
      %v221 = vld [vmem:[%s204 + $0x8] sm:$0xf]
      %v222 = vld [vmem:[%s204 + $0xc] sm:$0xf]
      %v223 = vld [vmem:[%s204 + $0x10] sm:$0xf]
      %v224 = vld [vmem:[%s204 + $0x14] sm:$0xf]
      %v225 = vld [vmem:[%s204 + $0x18] sm:$0xf]
      %v226 = vld [vmem:[%s204 + $0x1c] sm:$0xf]
      %v227 = vld [vmem:[%s204 + $0x20] sm:$0xf]
      %v228 = vld [vmem:[%s204 + $0x24] sm:$0xf]
      %v229 = vld [vmem:[%s204 + $0x28] sm:$0xf]
      %v230 = vld [vmem:[%s204 + $0x2c] sm:$0xf]
      %v231 = vld [vmem:[%s204 + $0x30] sm:$0xf]
      %v232 = vld [vmem:[%s204 + $0x34] sm:$0xf]
      %v233 = vld [vmem:[%s204 + $0x38] sm:$0xf]
      %v234 = vld [vmem:[%s204 + $0x3c] sm:$0xf]
      %v235 = vld [vmem:[%s207] sm:$0x1]
      %v237 = vperm.slane %v235, 0
      %v255 = vunpack.c.l.b16 %v219
      %v256 = vunpack.c.l.b16 %v220
      %v257 = vunpack.c.l.b16 %v221
      %v258 = vunpack.c.l.b16 %v222
      %v259 = vunpack.c.l.b16 %v223
      %v260 = vunpack.c.l.b16 %v224
      %v261 = vunpack.c.l.b16 %v225
      %v262 = vunpack.c.l.b16 %v226
      %v263 = vunpack.c.l.b16 %v227
      %v264 = vunpack.c.l.b16 %v228
      %v265 = vunpack.c.l.b16 %v229
      %v266 = vunpack.c.l.b16 %v230
      %v267 = vunpack.c.l.b16 %v231
      %v268 = vunpack.c.l.b16 %v232
      %v269 = vunpack.c.l.b16 %v233
      %v270 = vunpack.c.l.b16 %v234
      %v271 = vpack.c.b16 %v256, %v255
      %v272 = vpack.c.b16 %v258, %v257
      %v273 = vpack.c.b16 %v260, %v259
      %v274 = vpack.c.b16 %v262, %v261
      %v275 = vpack.c.b16 %v264, %v263
      %v276 = vpack.c.b16 %v266, %v265
      %v277 = vpack.c.b16 %v268, %v267
      %v278 = vpack.c.b16 %v270, %v269
      %287 = vmatpush.bf16.msra.mxu0 %v278
      %288 = vmatpush.bf16.msra.mxu0 %v277
      %289 = vmatpush.bf16.msra.mxu0 %v276
      %290 = vmatpush.bf16.msra.mxu0 %v275
      %291 = vmatpush.bf16.msra.mxu0 %v274
      %292 = vmatpush.bf16.msra.mxu0 %v273
      %293 = vmatpush.bf16.msra.mxu0 %v272
      %294 = vmatpush.bf16.msra.mxu0 %v271
      %295 = vmatmul.bf16.gmra.mxu0 %v218
      %v296 = vpop.f32.mrf.mxu0
      %v297 = vadd.f32 %v237, %v296
      %v298 = vpop.f32.mrf.mxu0
      %299 = vdwg.mxu0
      %v300 = vmax.f32 %v297, 0.0
      %v301 = vpack.c.bf16 %v300, %v300
      %302 = vst [vmem:[%s211] sm:$0xf] %v301
      %p303 = scmp.lt.s32.totalorder %s18, 0
      %s304 = scalar_select %p303, %s18, 0
      %s305 = smul.addr %s304, 4
      %s306 = scalar_lea.vmem %s3, %s305
      // Predicated region
      $region37: #{_lambda_.7} parent=31 // pred_check
        %p307 = pneg %p122
      $region38: #{_lambda_.7} parent=31 // pred_check_branch
        %309 = sbr.rel (%p307) target = $region40
      $region39: #{_lambda_.7} parent=31 // pred_region
        _
      $region40: #{_lambda_.7} parent=31 // pred_fallthru
        _
      // Predicated region
      $region41: #{_lambda_.7} parent=31 // pred_check
        %p310 = pneg %p122
      $region42: #{_lambda_.7} parent=31 // pred_check_branch
        %312 = sbr.rel (%p310) target = $region44
      $region43: #{_lambda_.7} parent=31 // pred_region
        %p313 = scmp.lt.s32.totalorder %s18, 0
        %s314 = scalar_select %p313, %s18, 0
        %s315 = smul.addr %s314, 4
        %s316 = scalar_lea.vmem %s3, %s315
      $region44: #{_lambda_.7} parent=31 // pred_fallthru
        _
    $region32: #{_lambda_.7} parent=5 // pred_fallthru
      _
    %p317 = scmp.le.s32.totalorder 2, %s9
    // Predicated region
    $region45: #{_lambda_.7} parent=5 // pred_check
      %p318 = pneg %p317
    $region46: #{_lambda_.7} parent=5 // pred_check_branch
      %320 = sbr.rel (%p318) target = $region48
    $region47: #{_lambda_.7} parent=5 // pred_region
      %s321 = ssub.s32 %s9, 2
    $region48: #{_lambda_.7} parent=5 // pred_fallthru
      _
  $region6: #{_lambda_.7} parent=0 // loop_footer
    %s13 = sadd.s32 1, %s9
  $region7: #{_lambda_.7} parent=0 // loop_footer_branch
    %8 = sbr.rel target = $region3
  $region8: #{_lambda_.7} parent=0 // loop_exit
    _

// kernel: _lambda_.6
$region0: #{_lambda_.6}
  #allocation0 [shape = 'u32[]', space=smem, size = 0x4, offset = 0x4, fixed_abs, tag = 'smem constant byte address 0x4 - core index']
  #allocation1 [shape = 'u32[72,128]{1,0:T(1,128)}', space=vmem, size = 0x9000, scoped, tag = 'internal scratch']
  %s0 = inlined_call_operand.vmem [shape: bf16[32,128], index: 0, kind: input, shape index: {}]
  %s1 = inlined_call_operand.vmem [shape: bf16[2,128,128], index: 1, kind: input, shape index: {}]
  %s2 = inlined_call_operand.vmem [shape: f32[2,1,128], index: 2, kind: input, shape index: {}]
  %s3 = inlined_call_operand.vmem [shape: bf16[32,128], index: 3, kind: output, shape index: {}]
  %s4 = sld [smem:[#allocation0]]
  $region49: #{_lambda_.6} parent=0
    _
  %s6 = ssub.s32 1, %s4
  %s7 = scalar_select 0, %s6, %s4
  loop: start=0, step=1, limit=4
  $region2: #{_lambda_.6} parent=0 // loop_pre_header
    _
  $region3: #{_lambda_.6} parent=0 // loop_header
    %s9 = sphi 0, %s13
    %p10 = scmp.ge.s32.totalorder %s9, 4
    %s16 = sphi 0, %s28
    %s17 = sphi 0, %s24
    %s18 = sphi 0, %s16
    %s19 = sphi 0, %s17
    %s20 = sphi 0, %s18
    %s21 = sphi 0, %s19
    %s31 = sphi 0, %s33
    %s34 = sphi 0, %s31
    %s35 = sphi 0, %s34
    %s51 = sphi 0, %s35
    %s57 = sphi 0, %s59
    %s60 = sphi 0, %s57
    %s61 = sphi 0, %s60
    %s77 = sphi 0, %s61
    %s83 = sphi 0, %s85
    %s86 = sphi 0, %s83
    %s87 = sphi 0, %s86
    %s103 = sphi 0, %s87
    %s109 = sphi 0, %s111
    %s112 = sphi 0, %s109
    %s113 = sphi 0, %s112
    %s129 = sphi 0, %s113
  $region4: #{_lambda_.6} parent=0 // loop_header_branch
    %12 = sbr.rel (%p10) target = $region8
  $region5: #{_lambda_.6} parent=0 // loop_body
    %s14 = ssub.s32 %s9, 1
    %s15 = ssub.s32 %s9, 2
    %s22 = sadd.s32 1, %s17
    %p23 = scmp.ge.s32.totalorder %s22, 2
    %s24 = scalar_select %p23, 0, %s22
    %s25 = sadd.s32 1, %s16
    %s26 = scalar_select %p23, %s25, %s16
    %p27 = scmp.ge.s32.totalorder %s26, 1
    %s28 = scalar_select %p27, 0, %s26
    %s29 = ssub.s32 %s16, %s28
    %p30 = scmp.eq.s32.totalorder %s29, 0
    %s32 = sadd.s32 %s31, 1
    %s33 = scalar_select %p30, %s31, %s32
    %p36 = pneg %p30
    %p37 = scmp.eq.s32.totalorder %s9, 1
    %p38 = por %p36, %p37
    %p39 = scmp.ne.s32.totalorder %s31, %s34
    %p40 = scmp.eq.s32.totalorder %s9, 0
    %p41 = por %p39, %p40
    %p42 = scmp.ne.s32.totalorder %s31, %s34
    %p43 = scmp.eq.s32.totalorder %s14, 1
    %p44 = por %p42, %p43
    %p45 = scmp.ne.s32.totalorder %s34, %s35
    %p46 = scmp.eq.s32.totalorder %s14, 0
    %p47 = por %p45, %p46
    %p48 = scmp.ne.s32.totalorder %s34, %s35
    %p49 = scmp.eq.s32.totalorder %s15, 1
    %p50 = por %p48, %p49
    %p52 = scmp.ne.s32.totalorder %s35, %s51
    %p53 = scmp.eq.s32.totalorder %s15, 0
    %p54 = por %p52, %p53
    %s55 = ssub.s32 %s17, %s24
    %p56 = scmp.eq.s32.totalorder %s55, 0
    %s58 = sadd.s32 %s57, 1
    %s59 = scalar_select %p56, %s57, %s58
    %p62 = pneg %p56
    %p63 = scmp.eq.s32.totalorder %s9, 1
    %p64 = por %p62, %p63
    %p65 = scmp.ne.s32.totalorder %s57, %s60
    %p66 = scmp.eq.s32.totalorder %s9, 0
    %p67 = por %p65, %p66
    %p68 = scmp.ne.s32.totalorder %s57, %s60
    %p69 = scmp.eq.s32.totalorder %s14, 1
    %p70 = por %p68, %p69
    %p71 = scmp.ne.s32.totalorder %s60, %s61
    %p72 = scmp.eq.s32.totalorder %s14, 0
    %p73 = por %p71, %p72
    %p74 = scmp.ne.s32.totalorder %s60, %s61
    %p75 = scmp.eq.s32.totalorder %s15, 1
    %p76 = por %p74, %p75
    %p78 = scmp.ne.s32.totalorder %s61, %s77
    %p79 = scmp.eq.s32.totalorder %s15, 0
    %p80 = por %p78, %p79
    %s81 = ssub.s32 %s17, %s24
    %p82 = scmp.eq.s32.totalorder %s81, 0
    %s84 = sadd.s32 %s83, 1
    %s85 = scalar_select %p82, %s83, %s84
    %p88 = pneg %p82
    %p89 = scmp.eq.s32.totalorder %s9, 1
    %p90 = por %p88, %p89
    %p91 = scmp.ne.s32.totalorder %s83, %s86
    %p92 = scmp.eq.s32.totalorder %s9, 0
    %p93 = por %p91, %p92
    %p94 = scmp.ne.s32.totalorder %s83, %s86
    %p95 = scmp.eq.s32.totalorder %s14, 1
    %p96 = por %p94, %p95
    %p97 = scmp.ne.s32.totalorder %s86, %s87
    %p98 = scmp.eq.s32.totalorder %s14, 0
    %p99 = por %p97, %p98
    %p100 = scmp.ne.s32.totalorder %s86, %s87
    %p101 = scmp.eq.s32.totalorder %s15, 1
    %p102 = por %p100, %p101
    %p104 = scmp.ne.s32.totalorder %s87, %s103
    %p105 = scmp.eq.s32.totalorder %s15, 0
    %p106 = por %p104, %p105
    %s107 = ssub.s32 %s16, %s28
    %p108 = scmp.eq.s32.totalorder %s107, 0
    %s110 = sadd.s32 %s109, 1
    %s111 = scalar_select %p108, %s109, %s110
    %p114 = pneg %p108
    %p115 = scmp.eq.s32.totalorder %s9, 1
    %p116 = por %p114, %p115
    %p117 = scmp.ne.s32.totalorder %s109, %s112
    %p118 = scmp.eq.s32.totalorder %s9, 0
    %p119 = por %p117, %p118
    %p120 = scmp.ne.s32.totalorder %s109, %s112
    %p121 = scmp.eq.s32.totalorder %s14, 1
    %p122 = por %p120, %p121
    %p123 = scmp.ne.s32.totalorder %s112, %s113
    %p124 = scmp.eq.s32.totalorder %s14, 0
    %p125 = por %p123, %p124
    %p126 = scmp.ne.s32.totalorder %s112, %s113
    %p127 = scmp.eq.s32.totalorder %s15, 1
    %p128 = por %p126, %p127
    %p130 = scmp.ne.s32.totalorder %s113, %s129
    %p131 = scmp.eq.s32.totalorder %s15, 0
    %p132 = por %p130, %p131
    %p133 = scmp.le.s32.totalorder 1, %s9
    %p134 = scmp.lt.s32.totalorder %s9, 3
    %p135 = pnand %p133, %p134
    %p136 = pneg %p135
    // Predicated region
    $region9: #{_lambda_.6} parent=5 // pred_check
      _
    $region10: #{_lambda_.6} parent=5 // pred_check_branch
      %138 = sbr.rel (%p135) target = $region12
    $region11: #{_lambda_.6} parent=5 // pred_region
      %s139 = ssub.s32 %s9, 1
      // Predicated region
      $region13: #{_lambda_.6} parent=11 // pred_check
        %p140 = pneg %p47
      $region14: #{_lambda_.6} parent=11 // pred_check_branch
        %142 = sbr.rel (%p140) target = $region16
      $region15: #{_lambda_.6} parent=11 // pred_region
        %s143 = smul.u32 4, %s18
        %p144 = scmp.lt.s32.totalorder %s143, 3
        %s145 = scalar_select %p144, %s143, 3
        %s146 = smul.addr %s145, 4
        %s147 = scalar_lea.vmem %s0, %s146
        %s148 = smul.u32 4, %s18
      $region16: #{_lambda_.6} parent=11 // pred_fallthru
        _
    $region12: #{_lambda_.6} parent=5 // pred_fallthru
      _
    %p149 = scmp.lt.s32.totalorder %s9, 2
    // Predicated region
    $region17: #{_lambda_.6} parent=5 // pred_check
      %p150 = pneg %p149
    $region18: #{_lambda_.6} parent=5 // pred_check_branch
      %152 = sbr.rel (%p150) target = $region20
    $region19: #{_lambda_.6} parent=5 // pred_region
      // Predicated region
      $region21: #{_lambda_.6} parent=19 // pred_check
        %p153 = pneg %p67
      $region22: #{_lambda_.6} parent=19 // pred_check_branch
        %155 = sbr.rel (%p153) target = $region24
      $region23: #{_lambda_.6} parent=19 // pred_region
        %p156 = scmp.lt.s32.totalorder %s17, 1
        %s157 = scalar_select %p156, %s17, 1
        %s158 = smul.addr %s157, 16
        %s159 = smul.addr %s158, 4
        %s160 = scalar_lea.vmem %s1, %s159
      $region24: #{_lambda_.6} parent=19 // pred_fallthru
        _
      // Predicated region
      $region25: #{_lambda_.6} parent=19 // pred_check
        %p161 = pneg %p93
      $region26: #{_lambda_.6} parent=19 // pred_check_branch
        %163 = sbr.rel (%p161) target = $region28
      $region27: #{_lambda_.6} parent=19 // pred_region
        %p164 = scmp.lt.s32.totalorder %s17, 1
        %s165 = scalar_select %p164, %s17, 1
        %s166 = scalar_lea.vmem %s2, %s165
      $region28: #{_lambda_.6} parent=19 // pred_fallthru
        _
    $region20: #{_lambda_.6} parent=5 // pred_fallthru
      _
    %p167 = scmp.le.s32.totalorder 1, %s9
    %p168 = scmp.lt.s32.totalorder %s9, 3
    %p169 = pnand %p167, %p168
    %p170 = pneg %p169
    // Predicated region
    $region29: #{_lambda_.6} parent=5 // pred_check
      _
    $region30: #{_lambda_.6} parent=5 // pred_check_branch
      %172 = sbr.rel (%p169) target = $region32
    $region31: #{_lambda_.6} parent=5 // pred_region
      %s173 = ssub.s32 %s9, 1
      %s174 = smul.u32 4, %s18
      %p175 = scmp.lt.s32.totalorder %s174, 3
      %s176 = scalar_select %p175, %s174, 3
      %s177 = smul.addr %s176, 4
      %s178 = scalar_lea.vmem %s0, %s177
      %p179 = pneg %p47
      %p180 = pneg %p44
      %p181 = scmp.lt.s32.totalorder %s19, 1
      %s182 = scalar_select %p181, %s19, 1
      %s183 = smul.addr %s182, 16
      %s184 = smul.addr %s183, 4
      %s185 = scalar_lea.vmem %s1, %s184
      %p186 = pneg %p73
      %p187 = pneg %p70
      %p188 = scmp.lt.s32.totalorder %s19, 1
      %s189 = scalar_select %p188, %s19, 1
      %s190 = scalar_lea.vmem %s2, %s189
      %p191 = pneg %p99
      %p192 = pneg %p96
      %p193 = pneg %p125
      %p194 = pneg %p122
      %s195 = smul.u32 4, %s18
      %p196 = scmp.lt.s32.totalorder %s195, 3
      %s197 = scalar_select %p196, %s195, 3
      %s198 = smul.addr %s197, 4
      %s199 = scalar_lea.vmem %s3, %s198
      %s200 = smul.u32 4, %s18
      %p201 = scmp.lt.s32.totalorder %s200, 3
      %s202 = scalar_select %p201, %s200, 3
      %s203 = smul.addr %s202, 4
      %s204 = scalar_lea.vmem %s0, %s203
      %s205 = smul.u32 4, %s18
      %p206 = scmp.lt.s32.totalorder %s19, 1
      %s207 = scalar_select %p206, %s19, 1
      %s208 = smul.addr %s207, 16
      %s209 = smul.addr %s208, 4
      %s210 = scalar_lea.vmem %s1, %s209
      %p211 = scmp.lt.s32.totalorder %s19, 1
      %s212 = scalar_select %p211, %s19, 1
      %s213 = scalar_lea.vmem %s2, %s212
      %s214 = smul.u32 4, %s18
      %p215 = scmp.lt.s32.totalorder %s214, 3
      %s216 = scalar_select %p215, %s214, 3
      %s217 = smul.addr %s216, 4
      %s218 = scalar_lea.vmem %s3, %s217
      %s219 = smul.u32 4, %s18
      %p220 = scmp.eq.s32.totalorder %s19, 0
      // Predicated region
      $region33: #{_lambda_.6} parent=31 // pred_check
        %p221 = pneg %p220
      $region34: #{_lambda_.6} parent=31 // pred_check_branch
        %223 = sbr.rel (%p221) target = $region36
      $region35: #{_lambda_.6} parent=31 // pred_region
        %v224 = vld [vmem:[%s204] sm:$0xf]
        %v225 = vld [vmem:[%s204 + $0x4] sm:$0xf]
        %v226 = vld [vmem:[%s204 + $0x8] sm:$0xf]
        %v227 = vld [vmem:[%s204 + $0xc] sm:$0xf]
        %228 = vst [vmem:[%s218] sm:$0xf] %v224
        %229 = vst [vmem:[%s218 + $0x4] sm:$0xf] %v225
        %230 = vst [vmem:[%s218 + $0x8] sm:$0xf] %v226
        %231 = vst [vmem:[%s218 + $0xc] sm:$0xf] %v227
      $region36: #{_lambda_.6} parent=31 // pred_fallthru
        _
      %v232 = vld [vmem:[%s218] sm:$0xf]
      %v233 = vld [vmem:[%s218 + $0x4] sm:$0xf]
      %v234 = vld [vmem:[%s218 + $0x8] sm:$0xf]
      %v235 = vld [vmem:[%s218 + $0xc] sm:$0xf]
      %v236 = vld [vmem:[%s210] sm:$0xf]
      %v237 = vld [vmem:[%s210 + $0x4] sm:$0xf]
      %v238 = vld [vmem:[%s210 + $0x8] sm:$0xf]
      %v239 = vld [vmem:[%s210 + $0xc] sm:$0xf]
      %v240 = vld [vmem:[%s210 + $0x10] sm:$0xf]
      %v241 = vld [vmem:[%s210 + $0x14] sm:$0xf]
      %v242 = vld [vmem:[%s210 + $0x18] sm:$0xf]
      %v243 = vld [vmem:[%s210 + $0x1c] sm:$0xf]
      %v244 = vld [vmem:[%s210 + $0x20] sm:$0xf]
      %v245 = vld [vmem:[%s210 + $0x24] sm:$0xf]
      %v246 = vld [vmem:[%s210 + $0x28] sm:$0xf]
      %v247 = vld [vmem:[%s210 + $0x2c] sm:$0xf]
      %v248 = vld [vmem:[%s210 + $0x30] sm:$0xf]
      %v249 = vld [vmem:[%s210 + $0x34] sm:$0xf]
      %v250 = vld [vmem:[%s210 + $0x38] sm:$0xf]
      %v251 = vld [vmem:[%s210 + $0x3c] sm:$0xf]
      %v252 = vld [vmem:[%s213] sm:$0x1]
      %v254 = vperm.slane %v252, 0
      %v260 = vunpack.c.l.b16 %v232
      %v261 = vunpack.c.l.b16 %v233
      %v262 = vunpack.c.l.b16 %v234
      %v263 = vunpack.c.l.b16 %v235
      %v264 = vpack.c.b16 %v261, %v260
      %v265 = vpack.c.b16 %v263, %v262
      %v284 = vunpack.c.l.b16 %v236
      %v285 = vunpack.c.l.b16 %v237
      %v286 = vunpack.c.l.b16 %v238
      %v287 = vunpack.c.l.b16 %v239
      %v288 = vunpack.c.l.b16 %v240
      %v289 = vunpack.c.l.b16 %v241
      %v290 = vunpack.c.l.b16 %v242
      %v291 = vunpack.c.l.b16 %v243
      %v292 = vunpack.c.l.b16 %v244
      %v293 = vunpack.c.l.b16 %v245
      %v294 = vunpack.c.l.b16 %v246
      %v295 = vunpack.c.l.b16 %v247
      %v296 = vunpack.c.l.b16 %v248
      %v297 = vunpack.c.l.b16 %v249
      %v298 = vunpack.c.l.b16 %v250
      %v299 = vunpack.c.l.b16 %v251
      %v300 = vpack.c.b16 %v285, %v284
      %v301 = vpack.c.b16 %v287, %v286
      %v302 = vpack.c.b16 %v289, %v288
      %v303 = vpack.c.b16 %v291, %v290
      %v304 = vpack.c.b16 %v293, %v292
      %v305 = vpack.c.b16 %v295, %v294
      %v306 = vpack.c.b16 %v297, %v296
      %v307 = vpack.c.b16 %v299, %v298
      %316 = vmatpush.bf16.msra.mxu0 %v307
      %317 = vmatpush.bf16.msra.mxu0 %v306
      %318 = vmatpush.bf16.msra.mxu0 %v305
      %319 = vmatpush.bf16.msra.mxu0 %v304
      %320 = vmatpush.bf16.msra.mxu0 %v303
      %321 = vmatpush.bf16.msra.mxu0 %v302
      %322 = vmatpush.bf16.msra.mxu0 %v301
      %323 = vmatpush.bf16.msra.mxu0 %v300
      %324 = vmatmul.bf16.gmra.mxu0 %v264
      %v325 = vpop.f32.mrf.mxu0
      %v326 = vadd.f32 %v254, %v325
      %v327 = vpop.f32.mrf.mxu0
      %v328 = vadd.f32 %v254, %v327
      %329 = vmatmul.bf16.gmra.mxu0 %v265
      %v330 = vpop.f32.mrf.mxu0
      %v331 = vadd.f32 %v254, %v330
      %v332 = vpop.f32.mrf.mxu0
      %v333 = vadd.f32 %v254, %v332
      %334 = vdwg.mxu0
      %v335 = vmax.f32 %v326, 0.0
      %v336 = vmax.f32 %v328, 0.0
      %v337 = vmax.f32 %v331, 0.0
      %v338 = vmax.f32 %v333, 0.0
      %v339 = vpack.c.bf16 %v335, %v335
      %v340 = vpack.c.bf16 %v336, %v336
      %v341 = vpack.c.bf16 %v337, %v337
      %v342 = vpack.c.bf16 %v338, %v338
      %343 = vst [vmem:[%s218] sm:$0xf] %v339
      %344 = vst [vmem:[%s218 + $0x4] sm:$0xf] %v340
      %345 = vst [vmem:[%s218 + $0x8] sm:$0xf] %v341
      %346 = vst [vmem:[%s218 + $0xc] sm:$0xf] %v342
      %s347 = smul.u32 4, %s18
      %p348 = scmp.lt.s32.totalorder %s347, 3
      %s349 = scalar_select %p348, %s347, 3
      %s350 = smul.addr %s349, 4
      %s351 = scalar_lea.vmem %s3, %s350
      // Predicated region
      $region37: #{_lambda_.6} parent=31 // pred_check
        %p352 = pneg %p122
      $region38: #{_lambda_.6} parent=31 // pred_check_branch
        %354 = sbr.rel (%p352) target = $region40
      $region39: #{_lambda_.6} parent=31 // pred_region
        %s355 = smul.u32 4, %s18
      $region40: #{_lambda_.6} parent=31 // pred_fallthru
        _
      // Predicated region
      $region41: #{_lambda_.6} parent=31 // pred_check
        %p356 = pneg %p122
      $region42: #{_lambda_.6} parent=31 // pred_check_branch
        %358 = sbr.rel (%p356) target = $region44
      $region43: #{_lambda_.6} parent=31 // pred_region
        %s359 = smul.u32 4, %s18
        %p360 = scmp.lt.s32.totalorder %s359, 3
        %s361 = scalar_select %p360, %s359, 3
        %s362 = smul.addr %s361, 4
        %s363 = scalar_lea.vmem %s3, %s362
      $region44: #{_lambda_.6} parent=31 // pred_fallthru
        _
    $region32: #{_lambda_.6} parent=5 // pred_fallthru
      _
    %p364 = scmp.le.s32.totalorder 2, %s9
    // Predicated region
    $region45: #{_lambda_.6} parent=5 // pred_check
      %p365 = pneg %p364
    $region46: #{_lambda_.6} parent=5 // pred_check_branch
      %367 = sbr.rel (%p365) target = $region48
    $region47: #{_lambda_.6} parent=5 // pred_region
      %s368 = ssub.s32 %s9, 2
    $region48: #{_lambda_.6} parent=5 // pred_fallthru
      _
  $region6: #{_lambda_.6} parent=0 // loop_footer
    %s13 = sadd.s32 1, %s9
  $region7: #{_lambda_.6} parent=0 // loop_footer_branch
    %8 = sbr.rel target = $region3
  $region8: #{_lambda_.6} parent=0 // loop_exit
    _

</llo_original>
